<compile_context>
chip_gen: v6e
topology: v6e:2x2x1
jax: 0.10.0
libtpu: 0.0.40
codegen_flags: <defaults>
</compile_context>

<pallas_src>
import functools

import numpy as np
import jax
import jax.numpy as jnp
from jax.experimental import pallas as pl
from jax.experimental.pallas import tpu as pltpu


# ------------------------------- helpers ------------------------------------

def _round_up(x, m):
    return (x + m - 1) // m * m


def _make_full_mask(H, W, Nb, C):
    """(9*C, Nb*H*W) f32 validity mask for the 9 taps of a 3x3 pad=1 conv.

    Tap-major / channel-minor rows (matching the im2col concat order) and
    tiled over the Nb lane-folded images, so ONE aligned select masks the
    whole im2col matrix (both image-boundary taps and cross-image roll
    wrap-around).  Built host-side with numpy; it is a trace-time constant.
    """
    hh, ww = np.meshgrid(np.arange(H), np.arange(W), indexing="ij")
    rows = []
    for dy in (-1, 0, 1):
        for dx in (-1, 0, 1):
            valid = ((hh + dy >= 0) & (hh + dy < H) &
                     (ww + dx >= 0) & (ww + dx < W)).reshape(-1)
            tap = np.tile(valid.astype(np.float32), Nb)          # (Nb*HW,)
            rows.append(np.broadcast_to(tap, (C, Nb * H * W)))   # channel bcast
    return jnp.asarray(np.concatenate(rows, axis=0))             # (9*C, Nb*HW)


# ------------------------------ fused kernel ---------------------------------

def _im2col_3x3(feat, mask_ref, W, HWT):
    """feat: (C, Nb*HW) lane-dense.  Returns the masked (9*C, Nb*HW) im2col.

    Taps are circular lane rolls (XLU); a single full-size select (VPU) zeroes
    every out-of-image tap (including cross-image wrap-around of the folded
    batch).  C is a multiple of 8 so the sublane concatenation is aligned.
    """
    taps = []
    for dy in (-1, 0, 1):
        for dx in (-1, 0, 1):
            s = dy * W + dx                                     # source offset
            if s == 0:
                taps.append(feat)
            else:
                # shifted[f] = feat[(f + s) mod HWT]  (np.roll convention)
                taps.append(pltpu.roll(feat, (-s) % HWT, 1))
    cols = jnp.concatenate(taps, axis=0)                        # (9*C, Nb*HW)
    # jnp.where (not multiply): masked Inf/NaN cannot produce 0*Inf = NaN.
    return jnp.where(mask_ref[...] > 0.5, cols, 0.0)


def _fused_forward_kernel(H, W, Nb, c_in_pad, seg_hook, cls_hook,
                          mask1_ref, mask2_ref, x_ref,
                          w1_ref, b1_ref, w2_ref, b2_ref,
                          segw_ref, segb_ref, clsw_ref, clsb_ref,
                          seg_ref, cls_ref):
    """Whole forward pass for Nb batch elements; everything stays in VMEM."""
    HW = H * W
    HWT = Nb * HW

    # Lane-fold the Nb images: (Nb, C, HW) -> (C, Nb*HW).  Each chunk is a
    # whole number of lane-vregs (HW % 128 == 0) so this is vreg placement.
    x_imgs = [x_ref[i].astype(jnp.float32) for i in range(Nb)]
    x = jnp.concatenate(x_imgs, axis=-1) if Nb > 1 else x_imgs[0]
    c_real = x.shape[0]
    if c_real < c_in_pad:
        # In-VMEM sublane pad to 8 channels (no extra HBM pass of the input).
        x = jnp.concatenate(
            [x, jnp.zeros((c_in_pad - c_real, HWT), jnp.float32)], axis=0)

    # backbone.layer1 : 3x3 conv (pad=1) + bias + ReLU — one MXU dot over im2col
    cols1 = _im2col_3x3(x, mask1_ref, W, HWT)                   # (9*Cin_pad, Nb*HW)
    h1 = jnp.dot(w1_ref[...], cols1, preferred_element_type=jnp.float32)
    h1 = jnp.maximum(h1 + b1_ref[...], 0.0)                     # (C1, Nb*HW)

    # backbone.layer2 : 3x3 conv (pad=1) + bias + ReLU
    cols2 = _im2col_3x3(h1, mask2_ref, W, HWT)                  # (9*C1, Nb*HW)
    h2 = jnp.dot(w2_ref[...], cols2, preferred_element_type=jnp.float32)
    h2 = jnp.maximum(h2 + b2_ref[...], 0.0)                     # (C2, Nb*HW)

    # "hooks": intermediate activations captured by layer name (static).
    feats = {"layer1": h1, "layer2": h2}

    # decoder['segmentsemantic'] : 1x1 conv, lane-dense, written directly NCHW.
    seg = jnp.dot(segw_ref[...], feats[seg_hook],
                  preferred_element_type=jnp.float32) + segb_ref[...]
    for i in range(Nb):                      # aligned (multiple-of-128) slices
        seg_ref[i] = seg[:, i * HW:(i + 1) * HW].astype(seg_ref.dtype)

    # decoder['class_*'] : GAP + Linear, reordered by linearity:
    # project first (lane-dense (ncls,C2)x(C2,Nb*HW) dot), pool per image after.
    proj = jnp.dot(clsw_ref[...], feats[cls_hook],
                   preferred_element_type=jnp.float32)          # (ncls, Nb*HW)
    means = [jnp.mean(proj[:, i * HW:(i + 1) * HW], axis=-1, keepdims=True)
             for i in range(Nb)]                                # Nb x (ncls, 1)
    cls_cols = jnp.concatenate(means, axis=-1) if Nb > 1 else means[0]
    cls_ref[0] = (cls_cols + clsb_ref[...]).astype(cls_ref.dtype)  # (ncls, Nb)


# --------------------------- MultiTaskModel_hooks ---------------------------

class MultiTaskModelHooksPallas:
    """JAX/Pallas analogue of MultiTaskModel_hooks.

    The backbone + hooks + decoders run in a single fused Pallas kernel; the
    named layer outputs (config['inter_hooks'][task]) stay in VMEM and feed
    the per-task decoders.
    """

    NB_MAX = 8   # batch elements folded into one grid step (lanes = Nb*H*W)

    def __init__(self, params, tasks, config):
        self.tasks = list(tasks)
        self.inter_hooks = dict(config["inter_hooks"])
        self.seg_task = "segmentsemantic"
        cls_tasks = [t for t in self.tasks if t != self.seg_task]
        self.cls_task = cls_tasks[0] if cls_tasks else None

        # -------- pack weights once into lane-dense kernel layouts ----------
        c_in = params["layer1_w"].shape[2]
        c1 = params["layer1_w"].shape[3]
        c2 = params["layer2_w"].shape[3]
        self.c_in = c_in
        self.c_in_pad = _round_up(c_in, 8)       # keep im2col sublane-aligned
        self.c1, self.c2 = c1, c2
        assert c1 % 8 == 0 and c2 % 8 == 0, \
            "intermediate channels must be multiples of 8"

        def pack_conv(w_hwio, c_pad):
            # (3,3,Cin,Cout) -> (Cout, 9*c_pad), zero-padding Cin to c_pad.
            kh, kw, cin, cout = w_hwio.shape
            w = jnp.pad(w_hwio, ((0, 0), (0, 0), (0, c_pad - cin), (0, 0)))
            return jnp.transpose(w.reshape(kh * kw * c_pad, cout))

        self.w1_t = pack_conv(params["layer1_w"], self.c_in_pad)  # (C1, 9*Cin_pad)
        self.b1 = params["layer1_b"].reshape(-1, 1)               # (C1, 1)
        self.w2_t = pack_conv(params["layer2_w"], c1)             # (C2, 9*C1)
        self.b2 = params["layer2_b"].reshape(-1, 1)               # (C2, 1)
        self.segw_t = jnp.transpose(params["seg_w"])              # (K, Chook)
        self.segb = params["seg_b"].reshape(-1, 1)                # (K, 1)
        self.clsw_t = jnp.transpose(params["cls_w"])              # (ncls, Chook)
        self.clsb = params["cls_b"].reshape(-1, 1)                # (ncls, 1)

        self._fwd = jax.jit(self._forward_impl)

    @staticmethod
    def _pick_nb(n, cap=NB_MAX):
        nb = 1
        for d in range(1, min(n, cap) + 1):
            if n % d == 0:
                nb = d
        return nb

    # ------------------------- fused forward ------------------------------
    def _forward_impl(self, x_nchw):
        N, C, H, W = x_nchw.shape
        HW = H * W
        assert C == self.c_in
        assert HW % 128 == 0, "H*W must be a multiple of 128 for lane tiling"
        Nb = self._pick_nb(N)
        HWT = Nb * HW

        # NCHW flattened IS the lane-dense (N, C, H*W) layout — no transpose,
        # no host-side channel pad (padding happens inside VMEM).
        x = x_nchw.reshape(N, C, HW).astype(jnp.float32)

        # Full-size boundary masks (trace-time constants) and pre-broadcast
        # biases: in-kernel bias adds / mask selects become aligned VPU ops.
        mask1 = _make_full_mask(H, W, Nb, self.c_in_pad)       # (9*Cin_pad, HWT)
        mask2 = _make_full_mask(H, W, Nb, self.c1)             # (9*C1, HWT)
        b1f = jnp.broadcast_to(self.b1, (self.c1, HWT))
        b2f = jnp.broadcast_to(self.b2, (self.c2, HWT))
        K = self.segw_t.shape[0]
        ncls = self.clsw_t.shape[0]
        segbf = jnp.broadcast_to(self.segb, (K, HWT))
        clsbf = jnp.broadcast_to(self.clsb, (ncls, Nb))

        seg_hook = self.inter_hooks[self.seg_task]
        cls_hook = self.inter_hooks[self.cls_task] if self.cls_task else "layer2"
        kernel = functools.partial(_fused_forward_kernel,
                                   H, W, Nb, self.c_in_pad, seg_hook, cls_hook)

        def full(arr):
            shape = arr.shape
            return pl.BlockSpec(shape, lambda nb, _n=len(shape): (0,) * _n)

        seg_flat, cls_blk = pl.pallas_call(
            kernel,
            grid=(N // Nb,),
            in_specs=[
                full(mask1), full(mask2),
                pl.BlockSpec((Nb, C, HW), lambda nb: (nb, 0, 0)),
                full(self.w1_t), full(b1f),
                full(self.w2_t), full(b2f),
                full(self.segw_t), full(segbf),
                full(self.clsw_t), full(clsbf),
            ],
            out_specs=(
                pl.BlockSpec((Nb, K, HW), lambda nb: (nb, 0, 0)),
                pl.BlockSpec((1, ncls, Nb), lambda nb: (nb, 0, 0)),
            ),
            out_shape=(
                jax.ShapeDtypeStruct((N, K, HW), jnp.float32),
                jax.ShapeDtypeStruct((N // Nb, ncls, Nb), jnp.float32),
            ),
            # On v7x, use pltpu.CORE_PARALLEL here to shard grid steps across
            # both TensorCores (kept portable for single-TC chips).
            compiler_params=pltpu.CompilerParams(
                dimension_semantics=("parallel",)),
        )(mask1, mask2, x, self.w1_t, b1f, self.w2_t, b2f,
          self.segw_t, segbf, self.clsw_t, clsbf)

        # (N, K, HW) row-major == NCHW: pure metadata reshape, no transpose.
        seg_out = seg_flat.reshape(N, K, H, W)
        # (N//Nb, ncls, Nb) -> (N, ncls): tiny XLA transpose of the logits.
        cls_out = jnp.transpose(cls_blk, (0, 2, 1)).reshape(N, ncls)
        return seg_out, cls_out

    def __call__(self, x_nchw):
        seg_nchw, cls_logits = self._fwd(x_nchw)
        task_outputs = {}
        for task in self.tasks:
            if task not in self.inter_hooks:
                raise Exception("task hook not specified")
            if task == self.seg_task:
                task_outputs[task] = seg_nchw
            else:
                task_outputs[task] = cls_logits
        return task_outputs


# SegmentationModelOutputWrapper equivalent: just selects the seg head output.
class SegmentationModelOutputWrapperPallas:
    def __init__(self, model):
        self.model = model

    def __call__(self, x):
        return self.model(x)["segmentsemantic"]


# --------------------------------- reference ---------------------------------

def _reference_forward(params, x_nchw, tasks, config):
    """Pure-JAX reference (lax conv) for correctness checking."""
    x = x_nchw.astype(jnp.float32)

    def conv3(x_nchw_, w_hwio, b):
        w_oihw = jnp.transpose(w_hwio, (3, 2, 0, 1))
        y = jax.lax.conv_general_dilated(
            x_nchw_, w_oihw, window_strides=(1, 1), padding=((1, 1), (1, 1)),
            dimension_numbers=("NCHW", "OIHW", "NCHW"))
        return jax.nn.relu(y + b[0][None, :, None, None])

    h1 = conv3(x, params["layer1_w"], params["layer1_b"])
    h2 = conv3(h1, params["layer2_w"], params["layer2_b"])
    layer_outputs = {"layer1": h1, "layer2": h2}
    out = {}
    for task in tasks:
        feat = layer_outputs[config["inter_hooks"][task]]
        if task == "segmentsemantic":
            out[task] = (jnp.einsum("nihw,io->nohw", feat, params["seg_w"])
                         + params["seg_b"][0][None, :, None, None])
        else:
            pooled = jnp.mean(feat, axis=(2, 3))
            out[task] = pooled @ params["cls_w"] + params["cls_b"]
    return out


# ----------------------------------- main -----------------------------------

if __name__ == "__main__":
    # Small shapes: batch=2, in-channels=4, spatial=16x16.
    N, C_IN, H, W = 2, 4, 16, 16
    C1, C2 = 8, 16
    NUM_SEG_CLASSES = 3
    NUM_CLS = 2

    tasks = ["segmentsemantic", "class_biglips"]
    config = {"inter_hooks": {"segmentsemantic": "layer1",
                              "class_biglips": "layer2"}}

    key = jax.random.PRNGKey(0)
    ks = jax.random.split(key, 8)
    params = {
        "layer1_w": 0.1 * jax.random.normal(ks[0], (3, 3, C_IN, C1), jnp.float32),
        "layer1_b": 0.1 * jax.random.normal(ks[1], (1, C1), jnp.float32),
        "layer2_w": 0.1 * jax.random.normal(ks[2], (3, 3, C1, C2), jnp.float32),
        "layer2_b": 0.1 * jax.random.normal(ks[3], (1, C2), jnp.float32),
        "seg_w":    0.1 * jax.random.normal(ks[4], (C1, NUM_SEG_CLASSES), jnp.float32),
        "seg_b":    0.1 * jax.random.normal(ks[5], (1, NUM_SEG_CLASSES), jnp.float32),
        "cls_w":    0.1 * jax.random.normal(ks[6], (C2, NUM_CLS), jnp.float32),
        "cls_b":    0.1 * jax.random.normal(ks[7], (1, NUM_CLS), jnp.float32),
    }

    x = jax.random.normal(jax.random.PRNGKey(1), (N, C_IN, H, W), jnp.float32)

    model = MultiTaskModelHooksPallas(params, tasks, config)
    outputs = model(x)
    jax.block_until_ready(outputs)

    # Sanity-check against pure-JAX reference.
    ref = _reference_forward(params, x, tasks, config)
    assert outputs["segmentsemantic"].shape == (N, NUM_SEG_CLASSES, H, W)
    assert outputs["class_biglips"].shape == (N, NUM_CLS)
    assert jnp.allclose(outputs["segmentsemantic"], ref["segmentsemantic"],
                        atol=1e-4, rtol=1e-4)
    assert jnp.allclose(outputs["class_biglips"], ref["class_biglips"],
                        atol=1e-4, rtol=1e-4)

    # SegmentationModelOutputWrapper equivalent also works.
    seg_only = SegmentationModelOutputWrapperPallas(model)(x)
    jax.block_until_ready(seg_only)
    assert seg_only.shape == (N, NUM_SEG_CLASSES, H, W)

    print("KERNEL_OK")
</pallas_src>

<mosaic_0001>
module attributes {stable_mosaic.version = 11 : i64} {
  func.func @_fused_forward_kernel(%arg0: i32, %arg1: memref<72x512xf32, #tpu.memory_space<vmem>>, %arg2: memref<72x512xf32, #tpu.memory_space<vmem>>, %arg3: memref<2x4x256xf32, #tpu.memory_space<vmem>>, %arg4: memref<8x72xf32, #tpu.memory_space<vmem>>, %arg5: memref<8x512xf32, #tpu.memory_space<vmem>>, %arg6: memref<16x72xf32, #tpu.memory_space<vmem>>, %arg7: memref<16x512xf32, #tpu.memory_space<vmem>>, %arg8: memref<3x8xf32, #tpu.memory_space<vmem>>, %arg9: memref<3x512xf32, #tpu.memory_space<vmem>>, %arg10: memref<2x16xf32, #tpu.memory_space<vmem>>, %arg11: memref<2x2xf32, #tpu.memory_space<vmem>>, %arg12: memref<2x3x256xf32, #tpu.memory_space<vmem>>, %arg13: memref<1x2x2xf32, #tpu.memory_space<vmem>>) attributes {dimension_semantics = [#tpu.dimension_semantics<parallel>], iteration_bounds = array<i64: 1>, scalar_prefetch = 0 : i64, scratch_operands = 0 : i64, tpu.core_type = #tpu.core_type<tc>, window_params = [{pipeline_mode = #tpu.pipeline_mode<synchronous>, transform_indices = @transform_0, window_bounds = array<i64: 72, 512>}, {pipeline_mode = #tpu.pipeline_mode<synchronous>, transform_indices = @transform_1, window_bounds = array<i64: 72, 512>}, {transform_indices = @transform_2, window_bounds = array<i64: 2, 4, 256>}, {pipeline_mode = #tpu.pipeline_mode<synchronous>, transform_indices = @transform_3, window_bounds = array<i64: 8, 72>}, {pipeline_mode = #tpu.pipeline_mode<synchronous>, transform_indices = @transform_4, window_bounds = array<i64: 8, 512>}, {pipeline_mode = #tpu.pipeline_mode<synchronous>, transform_indices = @transform_5, window_bounds = array<i64: 16, 72>}, {pipeline_mode = #tpu.pipeline_mode<synchronous>, transform_indices = @transform_6, window_bounds = array<i64: 16, 512>}, {pipeline_mode = #tpu.pipeline_mode<synchronous>, transform_indices = @transform_7, window_bounds = array<i64: 3, 8>}, {pipeline_mode = #tpu.pipeline_mode<synchronous>, transform_indices = @transform_8, window_bounds = array<i64: 3, 512>}, {pipeline_mode = #tpu.pipeline_mode<synchronous>, transform_indices = @transform_9, window_bounds = array<i64: 2, 16>}, {pipeline_mode = #tpu.pipeline_mode<synchronous>, transform_indices = @transform_10, window_bounds = array<i64: 2, 2>}, {transform_indices = @transform_11, window_bounds = array<i64: 2, 3, 256>}, {transform_indices = @transform_12, window_bounds = array<i64: 1, 2, 2>}]} {
    %c0 = arith.constant 0 : index
    %c0_0 = arith.constant 0 : index
    %c0_1 = arith.constant 0 : index
    %0 = vector.load %arg3[%c0, %c0_0, %c0_1] : memref<2x4x256xf32, #tpu.memory_space<vmem>>, vector<1x4x256xf32>
    %1 = vector.shape_cast %0 : vector<1x4x256xf32> to vector<4x256xf32>
    %c1 = arith.constant 1 : index
    %c0_2 = arith.constant 0 : index
    %c0_3 = arith.constant 0 : index
    %2 = vector.load %arg3[%c1, %c0_2, %c0_3] : memref<2x4x256xf32, #tpu.memory_space<vmem>>, vector<1x4x256xf32>
    %3 = vector.shape_cast %2 : vector<1x4x256xf32> to vector<4x256xf32>
    %4 = tpu.concatenate %1, %3 in 1 : vector<4x256xf32>, vector<4x256xf32> -> vector<4x512xf32>
    %cst = arith.constant 0.000000e+00 : f32
    %5 = vector.broadcast %cst : f32 to vector<4x512xf32>
    %6 = tpu.concatenate %4, %5 in 0 : vector<4x512xf32>, vector<4x512xf32> -> vector<8x512xf32>
    %c17_i32 = arith.constant 17 : i32
    %7 = tpu.dynamic_rotate %6 by %c17_i32 dim 1 : vector<8x512xf32>, i32 -> vector<8x512xf32>
    %c16_i32 = arith.constant 16 : i32
    %8 = tpu.dynamic_rotate %6 by %c16_i32 dim 1 : vector<8x512xf32>, i32 -> vector<8x512xf32>
    %c15_i32 = arith.constant 15 : i32
    %9 = tpu.dynamic_rotate %6 by %c15_i32 dim 1 : vector<8x512xf32>, i32 -> vector<8x512xf32>
    %c1_i32 = arith.constant 1 : i32
    %10 = tpu.dynamic_rotate %6 by %c1_i32 dim 1 : vector<8x512xf32>, i32 -> vector<8x512xf32>
    %c511_i32 = arith.constant 511 : i32
    %11 = tpu.dynamic_rotate %6 by %c511_i32 dim 1 : vector<8x512xf32>, i32 -> vector<8x512xf32>
    %c497_i32 = arith.constant 497 : i32
    %12 = tpu.dynamic_rotate %6 by %c497_i32 dim 1 : vector<8x512xf32>, i32 -> vector<8x512xf32>
    %c496_i32 = arith.constant 496 : i32
    %13 = tpu.dynamic_rotate %6 by %c496_i32 dim 1 : vector<8x512xf32>, i32 -> vector<8x512xf32>
    %c495_i32 = arith.constant 495 : i32
    %14 = tpu.dynamic_rotate %6 by %c495_i32 dim 1 : vector<8x512xf32>, i32 -> vector<8x512xf32>
    %15 = tpu.concatenate %7, %8, %9, %10, %6, %11, %12, %13, %14 in 0 : vector<8x512xf32>, vector<8x512xf32>, vector<8x512xf32>, vector<8x512xf32>, vector<8x512xf32>, vector<8x512xf32>, vector<8x512xf32>, vector<8x512xf32>, vector<8x512xf32> -> vector<72x512xf32>
    %c0_4 = arith.constant 0 : index
    %c0_5 = arith.constant 0 : index
    %16 = vector.load %arg1[%c0_4, %c0_5] : memref<72x512xf32, #tpu.memory_space<vmem>>, vector<72x512xf32>
    %cst_6 = arith.constant 5.000000e-01 : f32
    %17 = vector.broadcast %cst_6 : f32 to vector<72x512xf32>
    %18 = arith.cmpf ogt, %16, %17 : vector<72x512xf32>
    %cst_7 = arith.constant 0.000000e+00 : f32
    %19 = vector.broadcast %cst_7 : f32 to vector<72x512xf32>
    %20 = arith.select %18, %15, %19 : vector<72x512xi1>, vector<72x512xf32>
    %c0_8 = arith.constant 0 : index
    %c0_9 = arith.constant 0 : index
    %21 = vector.load %arg4[%c0_8, %c0_9] : memref<8x72xf32, #tpu.memory_space<vmem>>, vector<8x72xf32>
    %cst_10 = arith.constant dense<0.000000e+00> : vector<8x512xf32>
    %22 = tpu.matmul %21, %20, %cst_10 {dimension_numbers = #tpu.dot_dimension_numbers<[1], [0], [0], [1], [0, 0, 1, 1], [], []>} : vector<8x72xf32>, vector<72x512xf32>, vector<8x512xf32> -> vector<8x512xf32>
    %c0_11 = arith.constant 0 : index
    %c0_12 = arith.constant 0 : index
    %23 = vector.load %arg5[%c0_11, %c0_12] : memref<8x512xf32, #tpu.memory_space<vmem>>, vector<8x512xf32>
    %24 = arith.addf %22, %23 : vector<8x512xf32>
    %cst_13 = arith.constant 0.000000e+00 : f32
    %25 = vector.broadcast %cst_13 : f32 to vector<8x512xf32>
    %26 = arith.maximumf %24, %25 : vector<8x512xf32>
    %c17_i32_14 = arith.constant 17 : i32
    %27 = tpu.dynamic_rotate %26 by %c17_i32_14 dim 1 : vector<8x512xf32>, i32 -> vector<8x512xf32>
    %c16_i32_15 = arith.constant 16 : i32
    %28 = tpu.dynamic_rotate %26 by %c16_i32_15 dim 1 : vector<8x512xf32>, i32 -> vector<8x512xf32>
    %c15_i32_16 = arith.constant 15 : i32
    %29 = tpu.dynamic_rotate %26 by %c15_i32_16 dim 1 : vector<8x512xf32>, i32 -> vector<8x512xf32>
    %c1_i32_17 = arith.constant 1 : i32
    %30 = tpu.dynamic_rotate %26 by %c1_i32_17 dim 1 : vector<8x512xf32>, i32 -> vector<8x512xf32>
    %c511_i32_18 = arith.constant 511 : i32
    %31 = tpu.dynamic_rotate %26 by %c511_i32_18 dim 1 : vector<8x512xf32>, i32 -> vector<8x512xf32>
    %c497_i32_19 = arith.constant 497 : i32
    %32 = tpu.dynamic_rotate %26 by %c497_i32_19 dim 1 : vector<8x512xf32>, i32 -> vector<8x512xf32>
    %c496_i32_20 = arith.constant 496 : i32
    %33 = tpu.dynamic_rotate %26 by %c496_i32_20 dim 1 : vector<8x512xf32>, i32 -> vector<8x512xf32>
    %c495_i32_21 = arith.constant 495 : i32
    %34 = tpu.dynamic_rotate %26 by %c495_i32_21 dim 1 : vector<8x512xf32>, i32 -> vector<8x512xf32>
    %35 = tpu.concatenate %27, %28, %29, %30, %26, %31, %32, %33, %34 in 0 : vector<8x512xf32>, vector<8x512xf32>, vector<8x512xf32>, vector<8x512xf32>, vector<8x512xf32>, vector<8x512xf32>, vector<8x512xf32>, vector<8x512xf32>, vector<8x512xf32> -> vector<72x512xf32>
    %c0_22 = arith.constant 0 : index
    %c0_23 = arith.constant 0 : index
    %36 = vector.load %arg2[%c0_22, %c0_23] : memref<72x512xf32, #tpu.memory_space<vmem>>, vector<72x512xf32>
    %cst_24 = arith.constant 5.000000e-01 : f32
    %37 = vector.broadcast %cst_24 : f32 to vector<72x512xf32>
    %38 = arith.cmpf ogt, %36, %37 : vector<72x512xf32>
    %cst_25 = arith.constant 0.000000e+00 : f32
    %39 = vector.broadcast %cst_25 : f32 to vector<72x512xf32>
    %40 = arith.select %38, %35, %39 : vector<72x512xi1>, vector<72x512xf32>
    %c0_26 = arith.constant 0 : index
    %c0_27 = arith.constant 0 : index
    %41 = vector.load %arg6[%c0_26, %c0_27] : memref<16x72xf32, #tpu.memory_space<vmem>>, vector<16x72xf32>
    %cst_28 = arith.constant dense<0.000000e+00> : vector<16x512xf32>
    %42 = tpu.matmul %41, %40, %cst_28 {dimension_numbers = #tpu.dot_dimension_numbers<[1], [0], [0], [1], [0, 0, 1, 1], [], []>} : vector<16x72xf32>, vector<72x512xf32>, vector<16x512xf32> -> vector<16x512xf32>
    %c0_29 = arith.constant 0 : index
    %c0_30 = arith.constant 0 : index
    %43 = vector.load %arg7[%c0_29, %c0_30] : memref<16x512xf32, #tpu.memory_space<vmem>>, vector<16x512xf32>
    %44 = arith.addf %42, %43 : vector<16x512xf32>
    %cst_31 = arith.constant 0.000000e+00 : f32
    %45 = vector.broadcast %cst_31 : f32 to vector<16x512xf32>
    %46 = arith.maximumf %44, %45 : vector<16x512xf32>
    %c0_32 = arith.constant 0 : index
    %c0_33 = arith.constant 0 : index
    %47 = vector.load %arg8[%c0_32, %c0_33] : memref<3x8xf32, #tpu.memory_space<vmem>>, vector<3x8xf32>
    %cst_34 = arith.constant dense<0.000000e+00> : vector<3x512xf32>
    %48 = tpu.matmul %47, %26, %cst_34 {dimension_numbers = #tpu.dot_dimension_numbers<[1], [0], [0], [1], [0, 0, 1, 1], [], []>} : vector<3x8xf32>, vector<8x512xf32>, vector<3x512xf32> -> vector<3x512xf32>
    %c0_35 = arith.constant 0 : index
    %c0_36 = arith.constant 0 : index
    %49 = vector.load %arg9[%c0_35, %c0_36] : memref<3x512xf32, #tpu.memory_space<vmem>>, vector<3x512xf32>
    %50 = arith.addf %48, %49 : vector<3x512xf32>
    %51 = vector.extract_strided_slice %50 {offsets = [0, 0], sizes = [3, 256], strides = [1, 1]} : vector<3x512xf32> to vector<3x256xf32>
    %c0_37 = arith.constant 0 : index
    %c0_38 = arith.constant 0 : index
    %c0_39 = arith.constant 0 : index
    %52 = vector.load %arg12[%c0_37, %c0_38, %c0_39] : memref<2x3x256xf32, #tpu.memory_space<vmem>>, vector<1x3x256xf32>
    %53 = vector.shape_cast %52 : vector<1x3x256xf32> to vector<3x256xf32>
    %54 = vector.shape_cast %51 : vector<3x256xf32> to vector<1x3x256xf32>
    tpu.vector_store %arg12[%c0_37, %c0_38, %c0_39], %54 {strides = array<i32>} : memref<2x3x256xf32, #tpu.memory_space<vmem>>, vector<1x3x256xf32>,
    %55 = vector.extract_strided_slice %50 {offsets = [0, 256], sizes = [3, 256], strides = [1, 1]} : vector<3x512xf32> to vector<3x256xf32>
    %c1_40 = arith.constant 1 : index
    %c0_41 = arith.constant 0 : index
    %c0_42 = arith.constant 0 : index
    %56 = vector.load %arg12[%c1_40, %c0_41, %c0_42] : memref<2x3x256xf32, #tpu.memory_space<vmem>>, vector<1x3x256xf32>
    %57 = vector.shape_cast %56 : vector<1x3x256xf32> to vector<3x256xf32>
    %58 = vector.shape_cast %55 : vector<3x256xf32> to vector<1x3x256xf32>
    tpu.vector_store %arg12[%c1_40, %c0_41, %c0_42], %58 {strides = array<i32>} : memref<2x3x256xf32, #tpu.memory_space<vmem>>, vector<1x3x256xf32>,
    %c0_43 = arith.constant 0 : index
    %c0_44 = arith.constant 0 : index
    %59 = vector.load %arg10[%c0_43, %c0_44] : memref<2x16xf32, #tpu.memory_space<vmem>>, vector<2x16xf32>
    %cst_45 = arith.constant dense<0.000000e+00> : vector<2x512xf32>
    %60 = tpu.matmul %59, %46, %cst_45 {dimension_numbers = #tpu.dot_dimension_numbers<[1], [0], [0], [1], [0, 0, 1, 1], [], []>} : vector<2x16xf32>, vector<16x512xf32>, vector<2x512xf32> -> vector<2x512xf32>
    %61 = vector.extract_strided_slice %60 {offsets = [0, 0], sizes = [2, 256], strides = [1, 1]} : vector<2x512xf32> to vector<2x256xf32>
    %cst_46 = arith.constant dense<0.000000e+00> : vector<2xf32>
    %62 = vector.multi_reduction <add>, %61, %cst_46 [1] : vector<2x256xf32> to vector<2xf32>
    %63 = vector.shape_cast %62 : vector<2xf32> to vector<2x1xf32>
    %cst_47 = arith.constant 2.560000e+02 : f32
    %64 = vector.broadcast %cst_47 : f32 to vector<2x1xf32>
    %65 = arith.divf %63, %64 : vector<2x1xf32>
    %66 = vector.extract_strided_slice %60 {offsets = [0, 256], sizes = [2, 256], strides = [1, 1]} : vector<2x512xf32> to vector<2x256xf32>
    %cst_48 = arith.constant dense<0.000000e+00> : vector<2xf32>
    %67 = vector.multi_reduction <add>, %66, %cst_48 [1] : vector<2x256xf32> to vector<2xf32>
    %68 = vector.shape_cast %67 : vector<2xf32> to vector<2x1xf32>
    %cst_49 = arith.constant 2.560000e+02 : f32
    %69 = vector.broadcast %cst_49 : f32 to vector<2x1xf32>
    %70 = arith.divf %68, %69 : vector<2x1xf32>
    %71 = tpu.concatenate %65, %70 in 1 : vector<2x1xf32>, vector<2x1xf32> -> vector<2x2xf32>
    %c0_50 = arith.constant 0 : index
    %c0_51 = arith.constant 0 : index
    %72 = vector.load %arg11[%c0_50, %c0_51] : memref<2x2xf32, #tpu.memory_space<vmem>>, vector<2x2xf32>
    %73 = arith.addf %71, %72 : vector<2x2xf32>
    %c0_52 = arith.constant 0 : index
    %c0_53 = arith.constant 0 : index
    %c0_54 = arith.constant 0 : index
    %74 = vector.load %arg13[%c0_52, %c0_53, %c0_54] : memref<1x2x2xf32, #tpu.memory_space<vmem>>, vector<1x2x2xf32>
    %75 = vector.shape_cast %74 : vector<1x2x2xf32> to vector<2x2xf32>
    %76 = vector.shape_cast %73 : vector<2x2xf32> to vector<1x2x2xf32>
    tpu.vector_store %arg13[%c0_52, %c0_53, %c0_54], %76 {strides = array<i32>} : memref<1x2x2xf32, #tpu.memory_space<vmem>>, vector<1x2x2xf32>,
    return
  }
  func.func @transform_0(%arg0: i32) -> (i32, i32) {
    %c0_i32 = arith.constant 0 : i32
    %c0_i32_0 = arith.constant 0 : i32
    %c0_i32_1 = arith.constant 0 : i32
    return %c0_i32, %c0_i32_0 : i32, i32
  }
  func.func @transform_1(%arg0: i32) -> (i32, i32) {
    %c0_i32 = arith.constant 0 : i32
    %c0_i32_0 = arith.constant 0 : i32
    %c0_i32_1 = arith.constant 0 : i32
    return %c0_i32, %c0_i32_0 : i32, i32
  }
  func.func @transform_2(%arg0: i32) -> (i32, i32, i32) {
    %c0_i32 = arith.constant 0 : i32
    %c0_i32_0 = arith.constant 0 : i32
    %c0_i32_1 = arith.constant 0 : i32
    return %arg0, %c0_i32, %c0_i32_0 : i32, i32, i32
  }
  func.func @transform_3(%arg0: i32) -> (i32, i32) {
    %c0_i32 = arith.constant 0 : i32
    %c0_i32_0 = arith.constant 0 : i32
    %c0_i32_1 = arith.constant 0 : i32
    return %c0_i32, %c0_i32_0 : i32, i32
  }
  func.func @transform_4(%arg0: i32) -> (i32, i32) {
    %c0_i32 = arith.constant 0 : i32
    %c0_i32_0 = arith.constant 0 : i32
    %c0_i32_1 = arith.constant 0 : i32
    return %c0_i32, %c0_i32_0 : i32, i32
  }
  func.func @transform_5(%arg0: i32) -> (i32, i32) {
    %c0_i32 = arith.constant 0 : i32
    %c0_i32_0 = arith.constant 0 : i32
    %c0_i32_1 = arith.constant 0 : i32
    return %c0_i32, %c0_i32_0 : i32, i32
  }
  func.func @transform_6(%arg0: i32) -> (i32, i32) {
    %c0_i32 = arith.constant 0 : i32
    %c0_i32_0 = arith.constant 0 : i32
    %c0_i32_1 = arith.constant 0 : i32
    return %c0_i32, %c0_i32_0 : i32, i32
  }
  func.func @transform_7(%arg0: i32) -> (i32, i32) {
    %c0_i32 = arith.constant 0 : i32
    %c0_i32_0 = arith.constant 0 : i32
    %c0_i32_1 = arith.constant 0 : i32
    return %c0_i32, %c0_i32_0 : i32, i32
  }
  func.func @transform_8(%arg0: i32) -> (i32, i32) {
    %c0_i32 = arith.constant 0 : i32
    %c0_i32_0 = arith.constant 0 : i32
    %c0_i32_1 = arith.constant 0 : i32
    return %c0_i32, %c0_i32_0 : i32, i32
  }
  func.func @transform_9(%arg0: i32) -> (i32, i32) {
    %c0_i32 = arith.constant 0 : i32
    %c0_i32_0 = arith.constant 0 : i32
    %c0_i32_1 = arith.constant 0 : i32
    return %c0_i32, %c0_i32_0 : i32, i32
  }
  func.func @transform_10(%arg0: i32) -> (i32, i32) {
    %c0_i32 = arith.constant 0 : i32
    %c0_i32_0 = arith.constant 0 : i32
    %c0_i32_1 = arith.constant 0 : i32
    return %c0_i32, %c0_i32_0 : i32, i32
  }
  func.func @transform_11(%arg0: i32) -> (i32, i32, i32) {
    %c0_i32 = arith.constant 0 : i32
    %c0_i32_0 = arith.constant 0 : i32
    %c0_i32_1 = arith.constant 0 : i32
    return %arg0, %c0_i32, %c0_i32_0 : i32, i32, i32
  }
  func.func @transform_12(%arg0: i32) -> (i32, i32, i32) {
    %c0_i32 = arith.constant 0 : i32
    %c0_i32_0 = arith.constant 0 : i32
    %c0_i32_1 = arith.constant 0 : i32
    return %arg0, %c0_i32, %c0_i32_0 : i32, i32, i32
  }
}

</mosaic_0001>

<llo_original>
// kernel: _forward_impl.1
$region0: #{_forward_impl.1}
  #allocation0 [shape = 'u32[]', space=smem, size = 0x4, offset = 0x4, fixed_abs, tag = 'smem constant byte address 0x4 - core index']
  #allocation1 [shape = 'u32[144,128]{1,0:T(1,128)}', space=vmem, size = 0x12000, scoped, tag = 'internal scratch']
  %s0 = inlined_call_operand.hbm [shape: f32[72,512], index: 0, kind: input, shape index: {}, may-alias: {0,1}]
  %s1 = inlined_call_operand.hbm [shape: f32[72,512], index: 1, kind: input, shape index: {}, may-alias: {0,1}]
  %s2 = inlined_call_operand.vmem [shape: f32[2,4,256], index: 2, kind: input, shape index: {}]
  %s3 = inlined_call_operand.vmem [shape: f32[8,72], index: 3, kind: input, shape index: {}]
  %s4 = inlined_call_operand.vmem [shape: f32[8,512], index: 4, kind: input, shape index: {}]
  %s5 = inlined_call_operand.vmem [shape: f32[16,72], index: 5, kind: input, shape index: {}]
  %s6 = inlined_call_operand.vmem [shape: f32[16,512], index: 6, kind: input, shape index: {}]
  %s7 = inlined_call_operand.vmem [shape: f32[3,8], index: 7, kind: input, shape index: {}]
  %s8 = inlined_call_operand.vmem [shape: f32[3,512], index: 8, kind: input, shape index: {}]
  %s9 = inlined_call_operand.vmem [shape: f32[2,16], index: 9, kind: input, shape index: {}]
  %s10 = inlined_call_operand.vmem [shape: f32[2,2], index: 10, kind: input, shape index: {}]
  %s11 = inlined_call_operand.vmem [shape: f32[2,3,256], index: 11, kind: output, shape index: {0}]
  %s12 = inlined_call_operand.vmem [shape: f32[1,2,2], index: 12, kind: output, shape index: {1}]
  %13 = xla_tuple %s11, %s12
  %s14 = sld [smem:[#allocation0]]
  $region70: #{_forward_impl.1} parent=0
    _
  %s16 = ssub.s32 1, %s14
  %s17 = scalar_select 0, %s16, %s14
  $region1: #{_forward_impl.1} parent=0
    #allocation2 [shape = 'u8[147456]{0}', space=vmem, size = 0x24000, scoped, tag = 'input window, operand 0, single buffered']
    #allocation3 [shape = 's32[1]{0}', space=sflag, size = 0x4, scoped, tag = 'scoped memory for _forward_impl.1']
    #allocation4 [shape = 'u8[147456]{0}', space=vmem, size = 0x24000, scoped, tag = 'input window, operand 1, single buffered']
    #allocation5 [shape = 's32[1]{0}', space=sflag, size = 0x4, scoped, tag = 'scoped memory for _forward_impl.1']
    %18 = vsyncpa [#allocation3], 0
    %19 = vsyncpa [#allocation5], 0
    // Predicated region
    $region2: #{_forward_impl.1} parent=1 // pred_check
      _
    $region3: #{_forward_impl.1} parent=1 // pred_check_branch
      %21 = sbr.rel (0) target = $region5
    $region4: #{_forward_impl.1} parent=1 // pred_region
      %s23 = ssub.s32 4608, 4608
      %24 = vsyncadd [#allocation3], %s23
      %s25 = sshll.u32 [#allocation2], 4
      %s26 = int_to_ptr.vmem [resolvable:$true] %s25
      %31 = dma.hbm_to_vmem [thread:$0]  %s0, 4608, %s26, [#allocation3], 512, 512, 32
    $region5: #{_forward_impl.1} parent=1 // pred_fallthru
      _
    // Predicated region
    $region6: #{_forward_impl.1} parent=1 // pred_check
      _
    $region7: #{_forward_impl.1} parent=1 // pred_check_branch
      %33 = sbr.rel (0) target = $region9
    $region8: #{_forward_impl.1} parent=1 // pred_region
      %s35 = ssub.s32 4608, 4608
      %36 = vsyncadd [#allocation5], %s35
      %s37 = sshll.u32 [#allocation4], 4
      %s38 = int_to_ptr.vmem [resolvable:$true] %s37
      %43 = dma.hbm_to_vmem [thread:$0]  %s1, 4608, %s38, [#allocation5], 512, 512, 32
    $region9: #{_forward_impl.1} parent=1 // pred_fallthru
      _
    // Predicated region
    $region10: #{_forward_impl.1} parent=1 // pred_check
      _
    $region11: #{_forward_impl.1} parent=1 // pred_check_branch
      %45 = sbr.rel (0) target = $region13
    $region12: #{_forward_impl.1} parent=1 // pred_region
      _
    $region13: #{_forward_impl.1} parent=1 // pred_fallthru
      _
    // Predicated region
    $region14: #{_forward_impl.1} parent=1 // pred_check
      _
    $region15: #{_forward_impl.1} parent=1 // pred_check_branch
      %47 = sbr.rel (0) target = $region17
    $region16: #{_forward_impl.1} parent=1 // pred_region
      _
    $region17: #{_forward_impl.1} parent=1 // pred_fallthru
      _
    // Predicated region
    $region18: #{_forward_impl.1} parent=1 // pred_check
      _
    $region19: #{_forward_impl.1} parent=1 // pred_check_branch
      %49 = sbr.rel (0) target = $region21
    $region20: #{_forward_impl.1} parent=1 // pred_region
      _
    $region21: #{_forward_impl.1} parent=1 // pred_fallthru
      _
    // Predicated region
    $region22: #{_forward_impl.1} parent=1 // pred_check
      _
    $region23: #{_forward_impl.1} parent=1 // pred_check_branch
      %51 = sbr.rel (0) target = $region25
    $region24: #{_forward_impl.1} parent=1 // pred_region
      _
    $region25: #{_forward_impl.1} parent=1 // pred_fallthru
      _
    // Predicated region
    $region26: #{_forward_impl.1} parent=1 // pred_check
      _
    $region27: #{_forward_impl.1} parent=1 // pred_check_branch
      %53 = sbr.rel (0) target = $region29
    $region28: #{_forward_impl.1} parent=1 // pred_region
      _
    $region29: #{_forward_impl.1} parent=1 // pred_fallthru
      _
    // Predicated region
    $region30: #{_forward_impl.1} parent=1 // pred_check
      _
    $region31: #{_forward_impl.1} parent=1 // pred_check_branch
      %55 = sbr.rel (0) target = $region33
    $region32: #{_forward_impl.1} parent=1 // pred_region
      _
    $region33: #{_forward_impl.1} parent=1 // pred_fallthru
      _
    // Predicated region
    $region34: #{_forward_impl.1} parent=1 // pred_check
      _
    $region35: #{_forward_impl.1} parent=1 // pred_check_branch
      %57 = sbr.rel (0) target = $region37
    $region36: #{_forward_impl.1} parent=1 // pred_region
      _
    $region37: #{_forward_impl.1} parent=1 // pred_fallthru
      _
    // Predicated region
    $region38: #{_forward_impl.1} parent=1 // pred_check
      _
    $region39: #{_forward_impl.1} parent=1 // pred_check_branch
      %59 = sbr.rel (0) target = $region41
    $region40: #{_forward_impl.1} parent=1 // pred_region
      _
    $region41: #{_forward_impl.1} parent=1 // pred_fallthru
      _
    // Predicated region
    $region42: #{_forward_impl.1} parent=1 // pred_check
      _
    $region43: #{_forward_impl.1} parent=1 // pred_check_branch
      %61 = sbr.rel (0) target = $region45
    $region44: #{_forward_impl.1} parent=1 // pred_region
      _
    $region45: #{_forward_impl.1} parent=1 // pred_fallthru
      _
    // Predicated region
    $region46: #{_forward_impl.1} parent=1 // pred_check
      _
    $region47: #{_forward_impl.1} parent=1 // pred_check_branch
      %63 = sbr.rel (0) target = $region49
    $region48: #{_forward_impl.1} parent=1 // pred_region
      %64 = dma.done [#allocation3], 4608
    $region49: #{_forward_impl.1} parent=1 // pred_fallthru
      _
    // Predicated region
    $region50: #{_forward_impl.1} parent=1 // pred_check
      _
    $region51: #{_forward_impl.1} parent=1 // pred_check_branch
      %66 = sbr.rel (0) target = $region53
    $region52: #{_forward_impl.1} parent=1 // pred_region
      %67 = dma.done [#allocation5], 4608
    $region53: #{_forward_impl.1} parent=1 // pred_fallthru
      _
    %v68 = vld [vmem:[%s2] sm:$0xff]
    %s69 = scalar_lea.vmem %s2, 8
    %v70 = vld [vmem:[%s69] sm:$0xff]
    %v72 = vcombine.high %v68, %v68
    %v75 = vcombine.high %v70, %v70
    %vm77 = vcmask 1043456
    %v78 = vsel %vm77, %v68, 0.0
    %v79 = vsel %vm77, %v72, 0.0
    %v80 = vsel %vm77, %v70, 0.0
    %v81 = vsel %vm77, %v75, 0.0
    %82 = vrot.lane.b32.xlu0 %v78, 17
    %v83 = vpop.permute.xlu0 %82
    %84 = vrot.lane.b32.xlu0 %v79, 17
    %v85 = vpop.permute.xlu0 %84
    %86 = vrot.lane.b32.xlu0 %v80, 17
    %v87 = vpop.permute.xlu0 %86
    %88 = vrot.lane.b32.xlu0 %v81, 17
    %v89 = vpop.permute.xlu0 %88
    %v90 = vlaneseq
    %v91 = vand.u32 %v90, 127
    %vm92 = vcmp.lt.s32.totalorder %v91, 17
    %v93 = vsel %vm92, %v87, %v89
    %v94 = vsel %vm92, %v85, %v87
    %v95 = vsel %vm92, %v83, %v85
    %v96 = vsel %vm92, %v89, %v83
    %97 = vrot.lane.b32.xlu0 %v78, 16
    %v98 = vpop.permute.xlu0 %97
    %99 = vrot.lane.b32.xlu0 %v79, 16
    %v100 = vpop.permute.xlu0 %99
    %101 = vrot.lane.b32.xlu0 %v80, 16
    %v102 = vpop.permute.xlu0 %101
    %103 = vrot.lane.b32.xlu0 %v81, 16
    %v104 = vpop.permute.xlu0 %103
    %vm105 = vcmp.lt.s32.totalorder %v91, 16
    %v106 = vsel %vm105, %v102, %v104
    %v107 = vsel %vm105, %v100, %v102
    %v108 = vsel %vm105, %v98, %v100
    %v109 = vsel %vm105, %v104, %v98
    %110 = vrot.lane.b32.xlu0 %v78, 15
    %v111 = vpop.permute.xlu0 %110
    %112 = vrot.lane.b32.xlu0 %v79, 15
    %v113 = vpop.permute.xlu0 %112
    %114 = vrot.lane.b32.xlu0 %v80, 15
    %v115 = vpop.permute.xlu0 %114
    %116 = vrot.lane.b32.xlu0 %v81, 15
    %v117 = vpop.permute.xlu0 %116
    %vm118 = vcmp.lt.s32.totalorder %v91, 15
    %v119 = vsel %vm118, %v115, %v117
    %v120 = vsel %vm118, %v113, %v115
    %v121 = vsel %vm118, %v111, %v113
    %v122 = vsel %vm118, %v117, %v111
    %123 = vrot.lane.b32.xlu0 %v78, 1
    %v124 = vpop.permute.xlu0 %123
    %125 = vrot.lane.b32.xlu0 %v79, 1
    %v126 = vpop.permute.xlu0 %125
    %127 = vrot.lane.b32.xlu0 %v80, 1
    %v128 = vpop.permute.xlu0 %127
    %129 = vrot.lane.b32.xlu0 %v81, 1
    %v130 = vpop.permute.xlu0 %129
    %vm131 = vcmp.lt.s32.totalorder %v91, 1
    %v132 = vsel %vm131, %v128, %v130
    %v133 = vsel %vm131, %v126, %v128
    %v134 = vsel %vm131, %v124, %v126
    %v135 = vsel %vm131, %v130, %v124
    %136 = vrot.lane.b32.xlu0 %v78, 127
    %v137 = vpop.permute.xlu0 %136
    %138 = vrot.lane.b32.xlu0 %v79, 127
    %v139 = vpop.permute.xlu0 %138
    %140 = vrot.lane.b32.xlu0 %v80, 127
    %v141 = vpop.permute.xlu0 %140
    %142 = vrot.lane.b32.xlu0 %v81, 127
    %v143 = vpop.permute.xlu0 %142
    %vm144 = vcmp.lt.s32.totalorder %v91, 127
    %v145 = vsel %vm144, %v141, %v143
    %v146 = vsel %vm144, %v139, %v141
    %v147 = vsel %vm144, %v137, %v139
    %v148 = vsel %vm144, %v143, %v137
    %149 = vrot.lane.b32.xlu0 %v78, 113
    %v150 = vpop.permute.xlu0 %149
    %151 = vrot.lane.b32.xlu0 %v79, 113
    %v152 = vpop.permute.xlu0 %151
    %153 = vrot.lane.b32.xlu0 %v80, 113
    %v154 = vpop.permute.xlu0 %153
    %155 = vrot.lane.b32.xlu0 %v81, 113
    %v156 = vpop.permute.xlu0 %155
    %vm157 = vcmp.lt.s32.totalorder %v91, 113
    %v158 = vsel %vm157, %v154, %v156
    %v159 = vsel %vm157, %v152, %v154
    %v160 = vsel %vm157, %v150, %v152
    %v161 = vsel %vm157, %v156, %v150
    %162 = vrot.lane.b32.xlu0 %v78, 112
    %v163 = vpop.permute.xlu0 %162
    %164 = vrot.lane.b32.xlu0 %v79, 112
    %v165 = vpop.permute.xlu0 %164
    %166 = vrot.lane.b32.xlu0 %v80, 112
    %v167 = vpop.permute.xlu0 %166
    %168 = vrot.lane.b32.xlu0 %v81, 112
    %v169 = vpop.permute.xlu0 %168
    %vm170 = vcmp.lt.s32.totalorder %v91, 112
    %v171 = vsel %vm170, %v167, %v169
    %v172 = vsel %vm170, %v165, %v167
    %v173 = vsel %vm170, %v163, %v165
    %v174 = vsel %vm170, %v169, %v163
    %175 = vrot.lane.b32.xlu0 %v78, 111
    %v176 = vpop.permute.xlu0 %175
    %177 = vrot.lane.b32.xlu0 %v79, 111
    %v178 = vpop.permute.xlu0 %177
    %179 = vrot.lane.b32.xlu0 %v80, 111
    %v180 = vpop.permute.xlu0 %179
    %181 = vrot.lane.b32.xlu0 %v81, 111
    %v182 = vpop.permute.xlu0 %181
    %vm183 = vcmp.lt.s32.totalorder %v91, 111
    %v184 = vsel %vm183, %v180, %v182
    %v185 = vsel %vm183, %v178, %v180
    %v186 = vsel %vm183, %v176, %v178
    %v187 = vsel %vm183, %v182, %v176
    %v188 = vld [vmem:[#allocation2] sm:$0xff]
    %v189 = vld [vmem:[#allocation2 + $0x8] sm:$0xff]
    %v190 = vld [vmem:[#allocation2 + $0x10] sm:$0xff]
    %v191 = vld [vmem:[#allocation2 + $0x18] sm:$0xff]
    %v192 = vld [vmem:[#allocation2 + $0x20] sm:$0xff]
    %v193 = vld [vmem:[#allocation2 + $0x28] sm:$0xff]
    %v194 = vld [vmem:[#allocation2 + $0x30] sm:$0xff]
    %v195 = vld [vmem:[#allocation2 + $0x38] sm:$0xff]
    %v196 = vld [vmem:[#allocation2 + $0x40] sm:$0xff]
    %v197 = vld [vmem:[#allocation2 + $0x48] sm:$0xff]
    %v198 = vld [vmem:[#allocation2 + $0x50] sm:$0xff]
    %v199 = vld [vmem:[#allocation2 + $0x58] sm:$0xff]
    %v200 = vld [vmem:[#allocation2 + $0x60] sm:$0xff]
    %v201 = vld [vmem:[#allocation2 + $0x68] sm:$0xff]
    %v202 = vld [vmem:[#allocation2 + $0x70] sm:$0xff]
    %v203 = vld [vmem:[#allocation2 + $0x78] sm:$0xff]
    %v204 = vld [vmem:[#allocation2 + $0x80] sm:$0xff]
    %v205 = vld [vmem:[#allocation2 + $0x88] sm:$0xff]
    %v206 = vld [vmem:[#allocation2 + $0x90] sm:$0xff]
    %v207 = vld [vmem:[#allocation2 + $0x98] sm:$0xff]
    %v208 = vld [vmem:[#allocation2 + $0xa0] sm:$0xff]
    %v209 = vld [vmem:[#allocation2 + $0xa8] sm:$0xff]
    %v210 = vld [vmem:[#allocation2 + $0xb0] sm:$0xff]
    %v211 = vld [vmem:[#allocation2 + $0xb8] sm:$0xff]
    %v212 = vld [vmem:[#allocation2 + $0xc0] sm:$0xff]
    %v213 = vld [vmem:[#allocation2 + $0xc8] sm:$0xff]
    %v214 = vld [vmem:[#allocation2 + $0xd0] sm:$0xff]
    %v215 = vld [vmem:[#allocation2 + $0xd8] sm:$0xff]
    %v216 = vld [vmem:[#allocation2 + $0xe0] sm:$0xff]
    %v217 = vld [vmem:[#allocation2 + $0xe8] sm:$0xff]
    %v218 = vld [vmem:[#allocation2 + $0xf0] sm:$0xff]
    %v219 = vld [vmem:[#allocation2 + $0xf8] sm:$0xff]
    %v220 = vld [vmem:[#allocation2 + $0x100] sm:$0xff]
    %v221 = vld [vmem:[#allocation2 + $0x108] sm:$0xff]
    %v222 = vld [vmem:[#allocation2 + $0x110] sm:$0xff]
    %v223 = vld [vmem:[#allocation2 + $0x118] sm:$0xff]
    %vm224 = vcmp.gt.f32.partialorder %v188, 0.5
    %vm225 = vcmp.gt.f32.partialorder %v189, 0.5
    %vm226 = vcmp.gt.f32.partialorder %v190, 0.5
    %vm227 = vcmp.gt.f32.partialorder %v191, 0.5
    %vm228 = vcmp.gt.f32.partialorder %v192, 0.5
    %vm229 = vcmp.gt.f32.partialorder %v193, 0.5
    %vm230 = vcmp.gt.f32.partialorder %v194, 0.5
    %vm231 = vcmp.gt.f32.partialorder %v195, 0.5
    %vm232 = vcmp.gt.f32.partialorder %v196, 0.5
    %vm233 = vcmp.gt.f32.partialorder %v197, 0.5
    %vm234 = vcmp.gt.f32.partialorder %v198, 0.5
    %vm235 = vcmp.gt.f32.partialorder %v199, 0.5
    %vm236 = vcmp.gt.f32.partialorder %v200, 0.5
    %vm237 = vcmp.gt.f32.partialorder %v201, 0.5
    %vm238 = vcmp.gt.f32.partialorder %v202, 0.5
    %vm239 = vcmp.gt.f32.partialorder %v203, 0.5
    %vm240 = vcmp.gt.f32.partialorder %v204, 0.5
    %vm241 = vcmp.gt.f32.partialorder %v205, 0.5
    %vm242 = vcmp.gt.f32.partialorder %v206, 0.5
    %vm243 = vcmp.gt.f32.partialorder %v207, 0.5
    %vm244 = vcmp.gt.f32.partialorder %v208, 0.5
    %vm245 = vcmp.gt.f32.partialorder %v209, 0.5
    %vm246 = vcmp.gt.f32.partialorder %v210, 0.5
    %vm247 = vcmp.gt.f32.partialorder %v211, 0.5
    %vm248 = vcmp.gt.f32.partialorder %v212, 0.5
    %vm249 = vcmp.gt.f32.partialorder %v213, 0.5
    %vm250 = vcmp.gt.f32.partialorder %v214, 0.5
    %vm251 = vcmp.gt.f32.partialorder %v215, 0.5
    %vm252 = vcmp.gt.f32.partialorder %v216, 0.5
    %vm253 = vcmp.gt.f32.partialorder %v217, 0.5
    %vm254 = vcmp.gt.f32.partialorder %v218, 0.5
    %vm255 = vcmp.gt.f32.partialorder %v219, 0.5
    %vm256 = vcmp.gt.f32.partialorder %v220, 0.5
    %vm257 = vcmp.gt.f32.partialorder %v221, 0.5
    %vm258 = vcmp.gt.f32.partialorder %v222, 0.5
    %vm259 = vcmp.gt.f32.partialorder %v223, 0.5
    %v260 = vsel %vm224, %v96, 0.0
    %v261 = vsel %vm225, %v95, 0.0
    %v262 = vsel %vm226, %v94, 0.0
    %v263 = vsel %vm227, %v93, 0.0
    %v264 = vsel %vm228, %v109, 0.0
    %v265 = vsel %vm229, %v108, 0.0
    %v266 = vsel %vm230, %v107, 0.0
    %v267 = vsel %vm231, %v106, 0.0
    %v268 = vsel %vm232, %v122, 0.0
    %v269 = vsel %vm233, %v121, 0.0
    %v270 = vsel %vm234, %v120, 0.0
    %v271 = vsel %vm235, %v119, 0.0
    %v272 = vsel %vm236, %v135, 0.0
    %v273 = vsel %vm237, %v134, 0.0
    %v274 = vsel %vm238, %v133, 0.0
    %v275 = vsel %vm239, %v132, 0.0
    %v276 = vsel %vm240, %v78, 0.0
    %v277 = vsel %vm241, %v79, 0.0
    %v278 = vsel %vm242, %v80, 0.0
    %v279 = vsel %vm243, %v81, 0.0
    %v280 = vsel %vm244, %v147, 0.0
    %v281 = vsel %vm245, %v146, 0.0
    %v282 = vsel %vm246, %v145, 0.0
    %v283 = vsel %vm247, %v148, 0.0
    %v284 = vsel %vm248, %v160, 0.0
    %v285 = vsel %vm249, %v159, 0.0
    %v286 = vsel %vm250, %v158, 0.0
    %v287 = vsel %vm251, %v161, 0.0
    %v288 = vsel %vm252, %v173, 0.0
    %v289 = vsel %vm253, %v172, 0.0
    %v290 = vsel %vm254, %v171, 0.0
    %v291 = vsel %vm255, %v174, 0.0
    %v292 = vsel %vm256, %v186, 0.0
    %v293 = vsel %vm257, %v185, 0.0
    %v294 = vsel %vm258, %v184, 0.0
    %v295 = vsel %vm259, %v187, 0.0
    %v296 = vld [vmem:[%s3] sm:$0xff]
    %v297 = vld [vmem:[%s4] sm:$0xff]
    %v298 = vld [vmem:[%s4 + $0x8] sm:$0xff]
    %v299 = vld [vmem:[%s4 + $0x10] sm:$0xff]
    %v300 = vld [vmem:[%s4 + $0x18] sm:$0xff]
    %vm301 = vcmask 588800
    %v303 = vsel %vm301, %v296, 0
    %305 = vmatprep.subr.mxu0 0.0
    %306 = vmatpush1.msra.mxu0 0.0
    %307 = vmatprep.subr.mxu0 0.0
    %308 = vmatpush1.msra.mxu0 0.0
    %309 = vmatprep.subr.mxu0 0.0
    %310 = vmatpush1.msra.mxu0 0.0
    %311 = vmatprep.subr.mxu0 0.0
    %312 = vmatpush1.msra.mxu0 0.0
    %313 = vmatprep.subr.mxu0 0.0
    %314 = vmatpush1.msra.mxu0 0.0
    %315 = vmatprep.subr.mxu0 0.0
    %316 = vmatpush1.msra.mxu0 0.0
    %317 = vmatprep.subr.mxu0 0.0
    %318 = vmatpush1.msra.mxu0 0.0
    %319 = vmatprep.subr.mxu0 %v293
    %320 = vmatpush1.msra.mxu0 %v292
    %321 = vmatprep.subr.mxu0 %v289
    %322 = vmatpush1.msra.mxu0 %v288
    %323 = vmatprep.subr.mxu0 %v285
    %324 = vmatpush1.msra.mxu0 %v284
    %325 = vmatprep.subr.mxu0 %v281
    %326 = vmatpush1.msra.mxu0 %v280
    %327 = vmatprep.subr.mxu0 %v277
    %328 = vmatpush1.msra.mxu0 %v276
    %329 = vmatprep.subr.mxu0 %v273
    %330 = vmatpush1.msra.mxu0 %v272
    %331 = vmatprep.subr.mxu0 %v269
    %332 = vmatpush1.msra.mxu0 %v268
    %333 = vmatprep.subr.mxu0 %v265
    %334 = vmatpush1.msra.mxu0 %v264
    %335 = vmatprep.subr.mxu0 %v261
    %336 = vmatpush1.msra.mxu0 %v260
    %337 = vmatprep.subr.mxu0 0.0
    %338 = vmatpush2.msra.mxu0 0.0
    %339 = vmatprep.subr.mxu0 0.0
    %340 = vmatpush2.msra.mxu0 0.0
    %341 = vmatprep.subr.mxu0 0.0
    %342 = vmatpush2.msra.mxu0 0.0
    %343 = vmatprep.subr.mxu0 0.0
    %344 = vmatpush2.msra.mxu0 0.0
    %345 = vmatprep.subr.mxu0 0.0
    %346 = vmatpush2.msra.mxu0 0.0
    %347 = vmatprep.subr.mxu0 0.0
    %348 = vmatpush2.msra.mxu0 0.0
    %349 = vmatprep.subr.mxu0 0.0
    %350 = vmatpush2.msra.mxu0 0.0
    %351 = vmatprep.subr.mxu0 0.0
    %352 = vmatpush2.msra.mxu0 0.0
    %353 = vmatprep.subr.mxu0 0.0
    %354 = vmatpush2.msra.mxu0 0.0
    %355 = vmatprep.subr.mxu0 0.0
    %356 = vmatpush2.msra.mxu0 0.0
    %357 = vmatprep.subr.mxu0 0.0
    %358 = vmatpush2.msra.mxu0 0.0
    %359 = vmatprep.subr.mxu0 0.0
    %360 = vmatpush2.msra.mxu0 0.0
    %361 = vmatprep.subr.mxu0 0.0
    %362 = vmatpush2.msra.mxu0 0.0
    %363 = vmatprep.subr.mxu0 0.0
    %364 = vmatpush2.msra.mxu0 0.0
    %365 = vmatprep.subr.mxu0 0.0
    %366 = vmatpush2.msra.mxu0 0.0
    %367 = vmatprep.subr.mxu0 0.0
    %368 = vmatpush2.msra.mxu0 0.0
    %369 = vmatprep.mubr.f32.mxu0 0.0
    %370 = vmatmul.mubr.f32.gmra.mxu0 %v303
    %v371 = vpop.f32.mrf.mxu0
    %v372 = vadd.f32 %v297, %v371
    %v373 = vpop.f32.mrf.mxu0
    %v374 = vadd.f32 %v298, %v373
    %375 = vdwg.mxu0
    %376 = vmatprep.subr.mxu0 0.0
    %377 = vmatpush1.msra.mxu0 0.0
    %378 = vmatprep.subr.mxu0 0.0
    %379 = vmatpush1.msra.mxu0 0.0
    %380 = vmatprep.subr.mxu0 0.0
    %381 = vmatpush1.msra.mxu0 0.0
    %382 = vmatprep.subr.mxu0 0.0
    %383 = vmatpush1.msra.mxu0 0.0
    %384 = vmatprep.subr.mxu0 0.0
    %385 = vmatpush1.msra.mxu0 0.0
    %386 = vmatprep.subr.mxu0 0.0
    %387 = vmatpush1.msra.mxu0 0.0
    %388 = vmatprep.subr.mxu0 0.0
    %389 = vmatpush1.msra.mxu0 0.0
    %390 = vmatprep.subr.mxu0 %v295
    %391 = vmatpush1.msra.mxu0 %v294
    %392 = vmatprep.subr.mxu0 %v291
    %393 = vmatpush1.msra.mxu0 %v290
    %394 = vmatprep.subr.mxu0 %v287
    %395 = vmatpush1.msra.mxu0 %v286
    %396 = vmatprep.subr.mxu0 %v283
    %397 = vmatpush1.msra.mxu0 %v282
    %398 = vmatprep.subr.mxu0 %v279
    %399 = vmatpush1.msra.mxu0 %v278
    %400 = vmatprep.subr.mxu0 %v275
    %401 = vmatpush1.msra.mxu0 %v274
    %402 = vmatprep.subr.mxu0 %v271
    %403 = vmatpush1.msra.mxu0 %v270
    %404 = vmatprep.subr.mxu0 %v267
    %405 = vmatpush1.msra.mxu0 %v266
    %406 = vmatprep.subr.mxu0 %v263
    %407 = vmatpush1.msra.mxu0 %v262
    %408 = vmatprep.subr.mxu0 0.0
    %409 = vmatpush2.msra.mxu0 0.0
    %410 = vmatprep.subr.mxu0 0.0
    %411 = vmatpush2.msra.mxu0 0.0
    %412 = vmatprep.subr.mxu0 0.0
    %413 = vmatpush2.msra.mxu0 0.0
    %414 = vmatprep.subr.mxu0 0.0
    %415 = vmatpush2.msra.mxu0 0.0
    %416 = vmatprep.subr.mxu0 0.0
    %417 = vmatpush2.msra.mxu0 0.0
    %418 = vmatprep.subr.mxu0 0.0
    %419 = vmatpush2.msra.mxu0 0.0
    %420 = vmatprep.subr.mxu0 0.0
    %421 = vmatpush2.msra.mxu0 0.0
    %422 = vmatprep.subr.mxu0 0.0
    %423 = vmatpush2.msra.mxu0 0.0
    %424 = vmatprep.subr.mxu0 0.0
    %425 = vmatpush2.msra.mxu0 0.0
    %426 = vmatprep.subr.mxu0 0.0
    %427 = vmatpush2.msra.mxu0 0.0
    %428 = vmatprep.subr.mxu0 0.0
    %429 = vmatpush2.msra.mxu0 0.0
    %430 = vmatprep.subr.mxu0 0.0
    %431 = vmatpush2.msra.mxu0 0.0
    %432 = vmatprep.subr.mxu0 0.0
    %433 = vmatpush2.msra.mxu0 0.0
    %434 = vmatprep.subr.mxu0 0.0
    %435 = vmatpush2.msra.mxu0 0.0
    %436 = vmatprep.subr.mxu0 0.0
    %437 = vmatpush2.msra.mxu0 0.0
    %438 = vmatprep.subr.mxu0 0.0
    %439 = vmatpush2.msra.mxu0 0.0
    %440 = vmatprep.mubr.f32.mxu0 0.0
    %441 = vmatmul.mubr.f32.gmra.mxu0 %v303
    %v442 = vpop.f32.mrf.mxu0
    %v443 = vadd.f32 %v299, %v442
    %v444 = vpop.f32.mrf.mxu0
    %v445 = vadd.f32 %v300, %v444
    %446 = vdwg.mxu0
    %v447 = vmax.f32 %v372, 0.0
    %v448 = vmax.f32 %v374, 0.0
    %v449 = vmax.f32 %v443, 0.0
    %v450 = vmax.f32 %v445, 0.0
    %451 = vrot.lane.b32.xlu0 %v447, 17
    %v452 = vpop.permute.xlu0 %451
    %453 = vrot.lane.b32.xlu0 %v448, 17
    %v454 = vpop.permute.xlu0 %453
    %455 = vrot.lane.b32.xlu0 %v449, 17
    %v456 = vpop.permute.xlu0 %455
    %457 = vrot.lane.b32.xlu0 %v450, 17
    %v458 = vpop.permute.xlu0 %457
    %v459 = vsel %vm92, %v456, %v458
    %v460 = vsel %vm92, %v454, %v456
    %v461 = vsel %vm92, %v452, %v454
    %v462 = vsel %vm92, %v458, %v452
    %463 = vrot.lane.b32.xlu0 %v447, 16
    %v464 = vpop.permute.xlu0 %463
    %465 = vrot.lane.b32.xlu0 %v448, 16
    %v466 = vpop.permute.xlu0 %465
    %467 = vrot.lane.b32.xlu0 %v449, 16
    %v468 = vpop.permute.xlu0 %467
    %469 = vrot.lane.b32.xlu0 %v450, 16
    %v470 = vpop.permute.xlu0 %469
    %v471 = vsel %vm105, %v468, %v470
    %v472 = vsel %vm105, %v466, %v468
    %v473 = vsel %vm105, %v464, %v466
    %v474 = vsel %vm105, %v470, %v464
    %475 = vrot.lane.b32.xlu0 %v447, 15
    %v476 = vpop.permute.xlu0 %475
    %477 = vrot.lane.b32.xlu0 %v448, 15
    %v478 = vpop.permute.xlu0 %477
    %479 = vrot.lane.b32.xlu0 %v449, 15
    %v480 = vpop.permute.xlu0 %479
    %481 = vrot.lane.b32.xlu0 %v450, 15
    %v482 = vpop.permute.xlu0 %481
    %v483 = vsel %vm118, %v480, %v482
    %v484 = vsel %vm118, %v478, %v480
    %v485 = vsel %vm118, %v476, %v478
    %v486 = vsel %vm118, %v482, %v476
    %487 = vrot.lane.b32.xlu0 %v447, 1
    %v488 = vpop.permute.xlu0 %487
    %489 = vrot.lane.b32.xlu0 %v448, 1
    %v490 = vpop.permute.xlu0 %489
    %491 = vrot.lane.b32.xlu0 %v449, 1
    %v492 = vpop.permute.xlu0 %491
    %493 = vrot.lane.b32.xlu0 %v450, 1
    %v494 = vpop.permute.xlu0 %493
    %v495 = vsel %vm131, %v492, %v494
    %v496 = vsel %vm131, %v490, %v492
    %v497 = vsel %vm131, %v488, %v490
    %v498 = vsel %vm131, %v494, %v488
    %499 = vrot.lane.b32.xlu0 %v447, 127
    %v500 = vpop.permute.xlu0 %499
    %501 = vrot.lane.b32.xlu0 %v448, 127
    %v502 = vpop.permute.xlu0 %501
    %503 = vrot.lane.b32.xlu0 %v449, 127
    %v504 = vpop.permute.xlu0 %503
    %505 = vrot.lane.b32.xlu0 %v450, 127
    %v506 = vpop.permute.xlu0 %505
    %v507 = vsel %vm144, %v504, %v506
    %v508 = vsel %vm144, %v502, %v504
    %v509 = vsel %vm144, %v500, %v502
    %v510 = vsel %vm144, %v506, %v500
    %511 = vrot.lane.b32.xlu0 %v447, 113
    %v512 = vpop.permute.xlu0 %511
    %513 = vrot.lane.b32.xlu0 %v448, 113
    %v514 = vpop.permute.xlu0 %513
    %515 = vrot.lane.b32.xlu0 %v449, 113
    %v516 = vpop.permute.xlu0 %515
    %517 = vrot.lane.b32.xlu0 %v450, 113
    %v518 = vpop.permute.xlu0 %517
    %v519 = vsel %vm157, %v516, %v518
    %v520 = vsel %vm157, %v514, %v516
    %v521 = vsel %vm157, %v512, %v514
    %v522 = vsel %vm157, %v518, %v512
    %523 = vrot.lane.b32.xlu0 %v447, 112
    %v524 = vpop.permute.xlu0 %523
    %525 = vrot.lane.b32.xlu0 %v448, 112
    %v526 = vpop.permute.xlu0 %525
    %527 = vrot.lane.b32.xlu0 %v449, 112
    %v528 = vpop.permute.xlu0 %527
    %529 = vrot.lane.b32.xlu0 %v450, 112
    %v530 = vpop.permute.xlu0 %529
    %v531 = vsel %vm170, %v528, %v530
    %v532 = vsel %vm170, %v526, %v528
    %v533 = vsel %vm170, %v524, %v526
    %v534 = vsel %vm170, %v530, %v524
    %535 = vrot.lane.b32.xlu0 %v447, 111
    %v536 = vpop.permute.xlu0 %535
    %537 = vrot.lane.b32.xlu0 %v448, 111
    %v538 = vpop.permute.xlu0 %537
    %539 = vrot.lane.b32.xlu0 %v449, 111
    %v540 = vpop.permute.xlu0 %539
    %541 = vrot.lane.b32.xlu0 %v450, 111
    %v542 = vpop.permute.xlu0 %541
    %v543 = vsel %vm183, %v540, %v542
    %v544 = vsel %vm183, %v538, %v540
    %v545 = vsel %vm183, %v536, %v538
    %v546 = vsel %vm183, %v542, %v536
    %v547 = vld [vmem:[#allocation4] sm:$0xff]
    %v548 = vld [vmem:[#allocation4 + $0x8] sm:$0xff]
    %v549 = vld [vmem:[#allocation4 + $0x10] sm:$0xff]
    %v550 = vld [vmem:[#allocation4 + $0x18] sm:$0xff]
    %v551 = vld [vmem:[#allocation4 + $0x20] sm:$0xff]
    %v552 = vld [vmem:[#allocation4 + $0x28] sm:$0xff]
    %v553 = vld [vmem:[#allocation4 + $0x30] sm:$0xff]
    %v554 = vld [vmem:[#allocation4 + $0x38] sm:$0xff]
    %v555 = vld [vmem:[#allocation4 + $0x40] sm:$0xff]
    %v556 = vld [vmem:[#allocation4 + $0x48] sm:$0xff]
    %v557 = vld [vmem:[#allocation4 + $0x50] sm:$0xff]
    %v558 = vld [vmem:[#allocation4 + $0x58] sm:$0xff]
    %v559 = vld [vmem:[#allocation4 + $0x60] sm:$0xff]
    %v560 = vld [vmem:[#allocation4 + $0x68] sm:$0xff]
    %v561 = vld [vmem:[#allocation4 + $0x70] sm:$0xff]
    %v562 = vld [vmem:[#allocation4 + $0x78] sm:$0xff]
    %v563 = vld [vmem:[#allocation4 + $0x80] sm:$0xff]
    %v564 = vld [vmem:[#allocation4 + $0x88] sm:$0xff]
    %v565 = vld [vmem:[#allocation4 + $0x90] sm:$0xff]
    %v566 = vld [vmem:[#allocation4 + $0x98] sm:$0xff]
    %v567 = vld [vmem:[#allocation4 + $0xa0] sm:$0xff]
    %v568 = vld [vmem:[#allocation4 + $0xa8] sm:$0xff]
    %v569 = vld [vmem:[#allocation4 + $0xb0] sm:$0xff]
    %v570 = vld [vmem:[#allocation4 + $0xb8] sm:$0xff]
    %v571 = vld [vmem:[#allocation4 + $0xc0] sm:$0xff]
    %v572 = vld [vmem:[#allocation4 + $0xc8] sm:$0xff]
    %v573 = vld [vmem:[#allocation4 + $0xd0] sm:$0xff]
    %v574 = vld [vmem:[#allocation4 + $0xd8] sm:$0xff]
    %v575 = vld [vmem:[#allocation4 + $0xe0] sm:$0xff]
    %v576 = vld [vmem:[#allocation4 + $0xe8] sm:$0xff]
    %v577 = vld [vmem:[#allocation4 + $0xf0] sm:$0xff]
    %v578 = vld [vmem:[#allocation4 + $0xf8] sm:$0xff]
    %v579 = vld [vmem:[#allocation4 + $0x100] sm:$0xff]
    %v580 = vld [vmem:[#allocation4 + $0x108] sm:$0xff]
    %v581 = vld [vmem:[#allocation4 + $0x110] sm:$0xff]
    %v582 = vld [vmem:[#allocation4 + $0x118] sm:$0xff]
    %vm583 = vcmp.gt.f32.partialorder %v547, 0.5
    %vm584 = vcmp.gt.f32.partialorder %v548, 0.5
    %vm585 = vcmp.gt.f32.partialorder %v549, 0.5
    %vm586 = vcmp.gt.f32.partialorder %v550, 0.5
    %vm587 = vcmp.gt.f32.partialorder %v551, 0.5
    %vm588 = vcmp.gt.f32.partialorder %v552, 0.5
    %vm589 = vcmp.gt.f32.partialorder %v553, 0.5
    %vm590 = vcmp.gt.f32.partialorder %v554, 0.5
    %vm591 = vcmp.gt.f32.partialorder %v555, 0.5
    %vm592 = vcmp.gt.f32.partialorder %v556, 0.5
    %vm593 = vcmp.gt.f32.partialorder %v557, 0.5
    %vm594 = vcmp.gt.f32.partialorder %v558, 0.5
    %vm595 = vcmp.gt.f32.partialorder %v559, 0.5
    %vm596 = vcmp.gt.f32.partialorder %v560, 0.5
    %vm597 = vcmp.gt.f32.partialorder %v561, 0.5
    %vm598 = vcmp.gt.f32.partialorder %v562, 0.5
    %vm599 = vcmp.gt.f32.partialorder %v563, 0.5
    %vm600 = vcmp.gt.f32.partialorder %v564, 0.5
    %vm601 = vcmp.gt.f32.partialorder %v565, 0.5
    %vm602 = vcmp.gt.f32.partialorder %v566, 0.5
    %vm603 = vcmp.gt.f32.partialorder %v567, 0.5
    %vm604 = vcmp.gt.f32.partialorder %v568, 0.5
    %vm605 = vcmp.gt.f32.partialorder %v569, 0.5
    %vm606 = vcmp.gt.f32.partialorder %v570, 0.5
    %vm607 = vcmp.gt.f32.partialorder %v571, 0.5
    %vm608 = vcmp.gt.f32.partialorder %v572, 0.5
    %vm609 = vcmp.gt.f32.partialorder %v573, 0.5
    %vm610 = vcmp.gt.f32.partialorder %v574, 0.5
    %vm611 = vcmp.gt.f32.partialorder %v575, 0.5
    %vm612 = vcmp.gt.f32.partialorder %v576, 0.5
    %vm613 = vcmp.gt.f32.partialorder %v577, 0.5
    %vm614 = vcmp.gt.f32.partialorder %v578, 0.5
    %vm615 = vcmp.gt.f32.partialorder %v579, 0.5
    %vm616 = vcmp.gt.f32.partialorder %v580, 0.5
    %vm617 = vcmp.gt.f32.partialorder %v581, 0.5
    %vm618 = vcmp.gt.f32.partialorder %v582, 0.5
    %v619 = vsel %vm583, %v462, 0.0
    %v620 = vsel %vm584, %v461, 0.0
    %v621 = vsel %vm585, %v460, 0.0
    %v622 = vsel %vm586, %v459, 0.0
    %v623 = vsel %vm587, %v474, 0.0
    %v624 = vsel %vm588, %v473, 0.0
    %v625 = vsel %vm589, %v472, 0.0
    %v626 = vsel %vm590, %v471, 0.0
    %v627 = vsel %vm591, %v486, 0.0
    %v628 = vsel %vm592, %v485, 0.0
    %v629 = vsel %vm593, %v484, 0.0
    %v630 = vsel %vm594, %v483, 0.0
    %v631 = vsel %vm595, %v498, 0.0
    %v632 = vsel %vm596, %v497, 0.0
    %v633 = vsel %vm597, %v496, 0.0
    %v634 = vsel %vm598, %v495, 0.0
    %v635 = vsel %vm599, %v447, 0.0
    %v636 = vsel %vm600, %v448, 0.0
    %v637 = vsel %vm601, %v449, 0.0
    %v638 = vsel %vm602, %v450, 0.0
    %v639 = vsel %vm603, %v509, 0.0
    %v640 = vsel %vm604, %v508, 0.0
    %v641 = vsel %vm605, %v507, 0.0
    %v642 = vsel %vm606, %v510, 0.0
    %v643 = vsel %vm607, %v521, 0.0
    %v644 = vsel %vm608, %v520, 0.0
    %v645 = vsel %vm609, %v519, 0.0
    %v646 = vsel %vm610, %v522, 0.0
    %v647 = vsel %vm611, %v533, 0.0
    %v648 = vsel %vm612, %v532, 0.0
    %v649 = vsel %vm613, %v531, 0.0
    %v650 = vsel %vm614, %v534, 0.0
    %v651 = vsel %vm615, %v545, 0.0
    %v652 = vsel %vm616, %v544, 0.0
    %v653 = vsel %vm617, %v543, 0.0
    %v654 = vsel %vm618, %v546, 0.0
    %v655 = vld [vmem:[%s5] sm:$0xff]
    %v656 = vld [vmem:[%s5 + $0x8] sm:$0xff]
    %v657 = vld [vmem:[%s6] sm:$0xff]
    %v658 = vld [vmem:[%s6 + $0x8] sm:$0xff]
    %v659 = vld [vmem:[%s6 + $0x10] sm:$0xff]
    %v660 = vld [vmem:[%s6 + $0x18] sm:$0xff]
    %v661 = vld [vmem:[%s6 + $0x20] sm:$0xff]
    %v662 = vld [vmem:[%s6 + $0x28] sm:$0xff]
    %v663 = vld [vmem:[%s6 + $0x30] sm:$0xff]
    %v664 = vld [vmem:[%s6 + $0x38] sm:$0xff]
    %v666 = vsel %vm301, %v655, 0
    %v669 = vsel %vm301, %v656, 0
    %671 = vmatprep.subr.mxu0 0.0
    %672 = vmatpush1.msra.mxu0 0.0
    %673 = vmatprep.subr.mxu0 0.0
    %674 = vmatpush1.msra.mxu0 0.0
    %675 = vmatprep.subr.mxu0 0.0
    %676 = vmatpush1.msra.mxu0 0.0
    %677 = vmatprep.subr.mxu0 0.0
    %678 = vmatpush1.msra.mxu0 0.0
    %679 = vmatprep.subr.mxu0 0.0
    %680 = vmatpush1.msra.mxu0 0.0
    %681 = vmatprep.subr.mxu0 0.0
    %682 = vmatpush1.msra.mxu0 0.0
    %683 = vmatprep.subr.mxu0 0.0
    %684 = vmatpush1.msra.mxu0 0.0
    %685 = vmatprep.subr.mxu0 %v652
    %686 = vmatpush1.msra.mxu0 %v651
    %687 = vmatprep.subr.mxu0 %v648
    %688 = vmatpush1.msra.mxu0 %v647
    %689 = vmatprep.subr.mxu0 %v644
    %690 = vmatpush1.msra.mxu0 %v643
    %691 = vmatprep.subr.mxu0 %v640
    %692 = vmatpush1.msra.mxu0 %v639
    %693 = vmatprep.subr.mxu0 %v636
    %694 = vmatpush1.msra.mxu0 %v635
    %695 = vmatprep.subr.mxu0 %v632
    %696 = vmatpush1.msra.mxu0 %v631
    %697 = vmatprep.subr.mxu0 %v628
    %698 = vmatpush1.msra.mxu0 %v627
    %699 = vmatprep.subr.mxu0 %v624
    %700 = vmatpush1.msra.mxu0 %v623
    %701 = vmatprep.subr.mxu0 %v620
    %702 = vmatpush1.msra.mxu0 %v619
    %703 = vmatprep.subr.mxu0 0.0
    %704 = vmatpush2.msra.mxu0 0.0
    %705 = vmatprep.subr.mxu0 0.0
    %706 = vmatpush2.msra.mxu0 0.0
    %707 = vmatprep.subr.mxu0 0.0
    %708 = vmatpush2.msra.mxu0 0.0
    %709 = vmatprep.subr.mxu0 0.0
    %710 = vmatpush2.msra.mxu0 0.0
    %711 = vmatprep.subr.mxu0 0.0
    %712 = vmatpush2.msra.mxu0 0.0
    %713 = vmatprep.subr.mxu0 0.0
    %714 = vmatpush2.msra.mxu0 0.0
    %715 = vmatprep.subr.mxu0 0.0
    %716 = vmatpush2.msra.mxu0 0.0
    %717 = vmatprep.subr.mxu0 0.0
    %718 = vmatpush2.msra.mxu0 0.0
    %719 = vmatprep.subr.mxu0 0.0
    %720 = vmatpush2.msra.mxu0 0.0
    %721 = vmatprep.subr.mxu0 0.0
    %722 = vmatpush2.msra.mxu0 0.0
    %723 = vmatprep.subr.mxu0 0.0
    %724 = vmatpush2.msra.mxu0 0.0
    %725 = vmatprep.subr.mxu0 0.0
    %726 = vmatpush2.msra.mxu0 0.0
    %727 = vmatprep.subr.mxu0 0.0
    %728 = vmatpush2.msra.mxu0 0.0
    %729 = vmatprep.subr.mxu0 0.0
    %730 = vmatpush2.msra.mxu0 0.0
    %731 = vmatprep.subr.mxu0 0.0
    %732 = vmatpush2.msra.mxu0 0.0
    %733 = vmatprep.subr.mxu0 0.0
    %734 = vmatpush2.msra.mxu0 0.0
    %735 = vmatprep.mubr.f32.mxu0 0.0
    %736 = vmatmul.mubr.f32.gmra.mxu0 %v666
    %v737 = vpop.f32.mrf.mxu0
    %v738 = vadd.f32 %v657, %v737
    %v739 = vpop.f32.mrf.mxu0
    %v740 = vadd.f32 %v658, %v739
    %741 = vmatprep.mubr.f32.mxu0 0.0
    %742 = vmatmul.mubr.f32.gmra.mxu0 %v669
    %v743 = vpop.f32.mrf.mxu0
    %v744 = vadd.f32 %v661, %v743
    %v745 = vpop.f32.mrf.mxu0
    %v746 = vadd.f32 %v662, %v745
    %747 = vdwg.mxu0
    %748 = vmatprep.subr.mxu0 0.0
    %749 = vmatpush1.msra.mxu0 0.0
    %750 = vmatprep.subr.mxu0 0.0
    %751 = vmatpush1.msra.mxu0 0.0
    %752 = vmatprep.subr.mxu0 0.0
    %753 = vmatpush1.msra.mxu0 0.0
    %754 = vmatprep.subr.mxu0 0.0
    %755 = vmatpush1.msra.mxu0 0.0
    %756 = vmatprep.subr.mxu0 0.0
    %757 = vmatpush1.msra.mxu0 0.0
    %758 = vmatprep.subr.mxu0 0.0
    %759 = vmatpush1.msra.mxu0 0.0
    %760 = vmatprep.subr.mxu0 0.0
    %761 = vmatpush1.msra.mxu0 0.0
    %762 = vmatprep.subr.mxu0 %v654
    %763 = vmatpush1.msra.mxu0 %v653
    %764 = vmatprep.subr.mxu0 %v650
    %765 = vmatpush1.msra.mxu0 %v649
    %766 = vmatprep.subr.mxu0 %v646
    %767 = vmatpush1.msra.mxu0 %v645
    %768 = vmatprep.subr.mxu0 %v642
    %769 = vmatpush1.msra.mxu0 %v641
    %770 = vmatprep.subr.mxu0 %v638
    %771 = vmatpush1.msra.mxu0 %v637
    %772 = vmatprep.subr.mxu0 %v634
    %773 = vmatpush1.msra.mxu0 %v633
    %774 = vmatprep.subr.mxu0 %v630
    %775 = vmatpush1.msra.mxu0 %v629
    %776 = vmatprep.subr.mxu0 %v626
    %777 = vmatpush1.msra.mxu0 %v625
    %778 = vmatprep.subr.mxu0 %v622
    %779 = vmatpush1.msra.mxu0 %v621
    %780 = vmatprep.subr.mxu0 0.0
    %781 = vmatpush2.msra.mxu0 0.0
    %782 = vmatprep.subr.mxu0 0.0
    %783 = vmatpush2.msra.mxu0 0.0
    %784 = vmatprep.subr.mxu0 0.0
    %785 = vmatpush2.msra.mxu0 0.0
    %786 = vmatprep.subr.mxu0 0.0
    %787 = vmatpush2.msra.mxu0 0.0
    %788 = vmatprep.subr.mxu0 0.0
    %789 = vmatpush2.msra.mxu0 0.0
    %790 = vmatprep.subr.mxu0 0.0
    %791 = vmatpush2.msra.mxu0 0.0
    %792 = vmatprep.subr.mxu0 0.0
    %793 = vmatpush2.msra.mxu0 0.0
    %794 = vmatprep.subr.mxu0 0.0
    %795 = vmatpush2.msra.mxu0 0.0
    %796 = vmatprep.subr.mxu0 0.0
    %797 = vmatpush2.msra.mxu0 0.0
    %798 = vmatprep.subr.mxu0 0.0
    %799 = vmatpush2.msra.mxu0 0.0
    %800 = vmatprep.subr.mxu0 0.0
    %801 = vmatpush2.msra.mxu0 0.0
    %802 = vmatprep.subr.mxu0 0.0
    %803 = vmatpush2.msra.mxu0 0.0
    %804 = vmatprep.subr.mxu0 0.0
    %805 = vmatpush2.msra.mxu0 0.0
    %806 = vmatprep.subr.mxu0 0.0
    %807 = vmatpush2.msra.mxu0 0.0
    %808 = vmatprep.subr.mxu0 0.0
    %809 = vmatpush2.msra.mxu0 0.0
    %810 = vmatprep.subr.mxu0 0.0
    %811 = vmatpush2.msra.mxu0 0.0
    %812 = vmatprep.mubr.f32.mxu0 0.0
    %813 = vmatmul.mubr.f32.gmra.mxu0 %v666
    %v814 = vpop.f32.mrf.mxu0
    %v815 = vadd.f32 %v659, %v814
    %v816 = vpop.f32.mrf.mxu0
    %v817 = vadd.f32 %v660, %v816
    %818 = vmatprep.mubr.f32.mxu0 0.0
    %819 = vmatmul.mubr.f32.gmra.mxu0 %v669
    %v820 = vpop.f32.mrf.mxu0
    %v821 = vadd.f32 %v663, %v820
    %v822 = vpop.f32.mrf.mxu0
    %v823 = vadd.f32 %v664, %v822
    %824 = vdwg.mxu0
    %v825 = vmax.f32 %v738, 0.0
    %v826 = vmax.f32 %v740, 0.0
    %v827 = vmax.f32 %v815, 0.0
    %v828 = vmax.f32 %v817, 0.0
    %v829 = vmax.f32 %v744, 0.0
    %v830 = vmax.f32 %v746, 0.0
    %v831 = vmax.f32 %v821, 0.0
    %v832 = vmax.f32 %v823, 0.0
    %v833 = vld [vmem:[%s7] sm:$0x7]
    %v834 = vld [vmem:[%s8] sm:$0x77]
    %v835 = vld [vmem:[%s8 + $0x8] sm:$0x77]
    %v838 = vcombine.high %v834, %v834
    %v839 = vcombine.high %v835, %v835
    %vm842 = vcmask 64512
    %v844 = vsel %vm842, %v833, 0
    %846 = vmatprep.subr.mxu0 0.0
    %847 = vmatpush1.msra.mxu0 0.0
    %848 = vmatprep.subr.mxu0 0.0
    %849 = vmatpush1.msra.mxu0 0.0
    %850 = vmatprep.subr.mxu0 0.0
    %851 = vmatpush1.msra.mxu0 0.0
    %852 = vmatprep.subr.mxu0 0.0
    %853 = vmatpush1.msra.mxu0 0.0
    %854 = vmatprep.subr.mxu0 0.0
    %855 = vmatpush1.msra.mxu0 0.0
    %856 = vmatprep.subr.mxu0 0.0
    %857 = vmatpush1.msra.mxu0 0.0
    %858 = vmatprep.subr.mxu0 0.0
    %859 = vmatpush1.msra.mxu0 0.0
    %860 = vmatprep.subr.mxu0 0.0
    %861 = vmatpush1.msra.mxu0 0.0
    %862 = vmatprep.subr.mxu0 0.0
    %863 = vmatpush1.msra.mxu0 0.0
    %864 = vmatprep.subr.mxu0 0.0
    %865 = vmatpush1.msra.mxu0 0.0
    %866 = vmatprep.subr.mxu0 0.0
    %867 = vmatpush1.msra.mxu0 0.0
    %868 = vmatprep.subr.mxu0 0.0
    %869 = vmatpush1.msra.mxu0 0.0
    %870 = vmatprep.subr.mxu0 0.0
    %871 = vmatpush1.msra.mxu0 0.0
    %872 = vmatprep.subr.mxu0 0.0
    %873 = vmatpush1.msra.mxu0 0.0
    %874 = vmatprep.subr.mxu0 0.0
    %875 = vmatpush1.msra.mxu0 0.0
    %876 = vmatprep.subr.mxu0 %v448
    %877 = vmatpush1.msra.mxu0 %v447
    %878 = vmatprep.subr.mxu0 0.0
    %879 = vmatpush2.msra.mxu0 0.0
    %880 = vmatprep.subr.mxu0 0.0
    %881 = vmatpush2.msra.mxu0 0.0
    %882 = vmatprep.subr.mxu0 0.0
    %883 = vmatpush2.msra.mxu0 0.0
    %884 = vmatprep.subr.mxu0 0.0
    %885 = vmatpush2.msra.mxu0 0.0
    %886 = vmatprep.subr.mxu0 0.0
    %887 = vmatpush2.msra.mxu0 0.0
    %888 = vmatprep.subr.mxu0 0.0
    %889 = vmatpush2.msra.mxu0 0.0
    %890 = vmatprep.subr.mxu0 0.0
    %891 = vmatpush2.msra.mxu0 0.0
    %892 = vmatprep.subr.mxu0 0.0
    %893 = vmatpush2.msra.mxu0 0.0
    %894 = vmatprep.subr.mxu0 0.0
    %895 = vmatpush2.msra.mxu0 0.0
    %896 = vmatprep.subr.mxu0 0.0
    %897 = vmatpush2.msra.mxu0 0.0
    %898 = vmatprep.subr.mxu0 0.0
    %899 = vmatpush2.msra.mxu0 0.0
    %900 = vmatprep.subr.mxu0 0.0
    %901 = vmatpush2.msra.mxu0 0.0
    %902 = vmatprep.subr.mxu0 0.0
    %903 = vmatpush2.msra.mxu0 0.0
    %904 = vmatprep.subr.mxu0 0.0
    %905 = vmatpush2.msra.mxu0 0.0
    %906 = vmatprep.subr.mxu0 0.0
    %907 = vmatpush2.msra.mxu0 0.0
    %908 = vmatprep.subr.mxu0 0.0
    %909 = vmatpush2.msra.mxu0 0.0
    %910 = vmatprep.mubr.f32.mxu0 0.0
    %911 = vmatmul.mubr.f32.gmra.mxu0 %v844
    %v912 = vpop.f32.mrf.mxu0
    %v913 = vadd.f32 %v834, %v912
    %v914 = vpop.f32.mrf.mxu0
    %v915 = vadd.f32 %v838, %v914
    %916 = vdwg.mxu0
    %917 = vmatprep.subr.mxu0 0.0
    %918 = vmatpush1.msra.mxu0 0.0
    %919 = vmatprep.subr.mxu0 0.0
    %920 = vmatpush1.msra.mxu0 0.0
    %921 = vmatprep.subr.mxu0 0.0
    %922 = vmatpush1.msra.mxu0 0.0
    %923 = vmatprep.subr.mxu0 0.0
    %924 = vmatpush1.msra.mxu0 0.0
    %925 = vmatprep.subr.mxu0 0.0
    %926 = vmatpush1.msra.mxu0 0.0
    %927 = vmatprep.subr.mxu0 0.0
    %928 = vmatpush1.msra.mxu0 0.0
    %929 = vmatprep.subr.mxu0 0.0
    %930 = vmatpush1.msra.mxu0 0.0
    %931 = vmatprep.subr.mxu0 0.0
    %932 = vmatpush1.msra.mxu0 0.0
    %933 = vmatprep.subr.mxu0 0.0
    %934 = vmatpush1.msra.mxu0 0.0
    %935 = vmatprep.subr.mxu0 0.0
    %936 = vmatpush1.msra.mxu0 0.0
    %937 = vmatprep.subr.mxu0 0.0
    %938 = vmatpush1.msra.mxu0 0.0
    %939 = vmatprep.subr.mxu0 0.0
    %940 = vmatpush1.msra.mxu0 0.0
    %941 = vmatprep.subr.mxu0 0.0
    %942 = vmatpush1.msra.mxu0 0.0
    %943 = vmatprep.subr.mxu0 0.0
    %944 = vmatpush1.msra.mxu0 0.0
    %945 = vmatprep.subr.mxu0 0.0
    %946 = vmatpush1.msra.mxu0 0.0
    %947 = vmatprep.subr.mxu0 %v450
    %948 = vmatpush1.msra.mxu0 %v449
    %949 = vmatprep.subr.mxu0 0.0
    %950 = vmatpush2.msra.mxu0 0.0
    %951 = vmatprep.subr.mxu0 0.0
    %952 = vmatpush2.msra.mxu0 0.0
    %953 = vmatprep.subr.mxu0 0.0
    %954 = vmatpush2.msra.mxu0 0.0
    %955 = vmatprep.subr.mxu0 0.0
    %956 = vmatpush2.msra.mxu0 0.0
    %957 = vmatprep.subr.mxu0 0.0
    %958 = vmatpush2.msra.mxu0 0.0
    %959 = vmatprep.subr.mxu0 0.0
    %960 = vmatpush2.msra.mxu0 0.0
    %961 = vmatprep.subr.mxu0 0.0
    %962 = vmatpush2.msra.mxu0 0.0
    %963 = vmatprep.subr.mxu0 0.0
    %964 = vmatpush2.msra.mxu0 0.0
    %965 = vmatprep.subr.mxu0 0.0
    %966 = vmatpush2.msra.mxu0 0.0
    %967 = vmatprep.subr.mxu0 0.0
    %968 = vmatpush2.msra.mxu0 0.0
    %969 = vmatprep.subr.mxu0 0.0
    %970 = vmatpush2.msra.mxu0 0.0
    %971 = vmatprep.subr.mxu0 0.0
    %972 = vmatpush2.msra.mxu0 0.0
    %973 = vmatprep.subr.mxu0 0.0
    %974 = vmatpush2.msra.mxu0 0.0
    %975 = vmatprep.subr.mxu0 0.0
    %976 = vmatpush2.msra.mxu0 0.0
    %977 = vmatprep.subr.mxu0 0.0
    %978 = vmatpush2.msra.mxu0 0.0
    %979 = vmatprep.subr.mxu0 0.0
    %980 = vmatpush2.msra.mxu0 0.0
    %981 = vmatprep.mubr.f32.mxu0 0.0
    %982 = vmatmul.mubr.f32.gmra.mxu0 %v844
    %v983 = vpop.f32.mrf.mxu0
    %v984 = vadd.f32 %v835, %v983
    %v985 = vpop.f32.mrf.mxu0
    %v986 = vadd.f32 %v839, %v985
    %987 = vdwg.mxu0
    %v990 = vcombine.low %v913, %v915
    %992 = vst [vmem:[%s11] sm:$0x77] %v990
    %v995 = vcombine.low %v984, %v986
    %s997 = scalar_lea.vmem %s11, 8
    %998 = vst [vmem:[%s997] sm:$0x77] %v995
    %v999 = vld [vmem:[%s9] sm:$0x3]
    %vm1000 = vcmask 130048
    %v1002 = vsel %vm1000, %v999, 0
    %1004 = vmatprep.subr.mxu0 0.0
    %1005 = vmatpush1.msra.mxu0 0.0
    %1006 = vmatprep.subr.mxu0 0.0
    %1007 = vmatpush1.msra.mxu0 0.0
    %1008 = vmatprep.subr.mxu0 0.0
    %1009 = vmatpush1.msra.mxu0 0.0
    %1010 = vmatprep.subr.mxu0 0.0
    %1011 = vmatpush1.msra.mxu0 0.0
    %1012 = vmatprep.subr.mxu0 0.0
    %1013 = vmatpush1.msra.mxu0 0.0
    %1014 = vmatprep.subr.mxu0 0.0
    %1015 = vmatpush1.msra.mxu0 0.0
    %1016 = vmatprep.subr.mxu0 0.0
    %1017 = vmatpush1.msra.mxu0 0.0
    %1018 = vmatprep.subr.mxu0 0.0
    %1019 = vmatpush1.msra.mxu0 0.0
    %1020 = vmatprep.subr.mxu0 0.0
    %1021 = vmatpush1.msra.mxu0 0.0
    %1022 = vmatprep.subr.mxu0 0.0
    %1023 = vmatpush1.msra.mxu0 0.0
    %1024 = vmatprep.subr.mxu0 0.0
    %1025 = vmatpush1.msra.mxu0 0.0
    %1026 = vmatprep.subr.mxu0 0.0
    %1027 = vmatpush1.msra.mxu0 0.0
    %1028 = vmatprep.subr.mxu0 0.0
    %1029 = vmatpush1.msra.mxu0 0.0
    %1030 = vmatprep.subr.mxu0 0.0
    %1031 = vmatpush1.msra.mxu0 0.0
    %1032 = vmatprep.subr.mxu0 %v830
    %1033 = vmatpush1.msra.mxu0 %v829
    %1034 = vmatprep.subr.mxu0 %v826
    %1035 = vmatpush1.msra.mxu0 %v825
    %1036 = vmatprep.subr.mxu0 0.0
    %1037 = vmatpush2.msra.mxu0 0.0
    %1038 = vmatprep.subr.mxu0 0.0
    %1039 = vmatpush2.msra.mxu0 0.0
    %1040 = vmatprep.subr.mxu0 0.0
    %1041 = vmatpush2.msra.mxu0 0.0
    %1042 = vmatprep.subr.mxu0 0.0
    %1043 = vmatpush2.msra.mxu0 0.0
    %1044 = vmatprep.subr.mxu0 0.0
    %1045 = vmatpush2.msra.mxu0 0.0
    %1046 = vmatprep.subr.mxu0 0.0
    %1047 = vmatpush2.msra.mxu0 0.0
    %1048 = vmatprep.subr.mxu0 0.0
    %1049 = vmatpush2.msra.mxu0 0.0
    %1050 = vmatprep.subr.mxu0 0.0
    %1051 = vmatpush2.msra.mxu0 0.0
    %1052 = vmatprep.subr.mxu0 0.0
    %1053 = vmatpush2.msra.mxu0 0.0
    %1054 = vmatprep.subr.mxu0 0.0
    %1055 = vmatpush2.msra.mxu0 0.0
    %1056 = vmatprep.subr.mxu0 0.0
    %1057 = vmatpush2.msra.mxu0 0.0
    %1058 = vmatprep.subr.mxu0 0.0
    %1059 = vmatpush2.msra.mxu0 0.0
    %1060 = vmatprep.subr.mxu0 0.0
    %1061 = vmatpush2.msra.mxu0 0.0
    %1062 = vmatprep.subr.mxu0 0.0
    %1063 = vmatpush2.msra.mxu0 0.0
    %1064 = vmatprep.subr.mxu0 0.0
    %1065 = vmatpush2.msra.mxu0 0.0
    %1066 = vmatprep.subr.mxu0 0.0
    %1067 = vmatpush2.msra.mxu0 0.0
    %1068 = vmatprep.mubr.f32.mxu0 0.0
    %1069 = vmatmul.mubr.f32.gmra.mxu0 %v1002
    %v1070 = vpop.f32.mrf.mxu0
    %v1071 = vadd.f32 0.0, %v1070
    %v1072 = vpop.f32.mrf.mxu0
    %v1073 = vadd.f32 0.0, %v1072
    %1074 = vdwg.mxu0
    %1075 = vmatprep.subr.mxu0 0.0
    %1076 = vmatpush1.msra.mxu0 0.0
    %1077 = vmatprep.subr.mxu0 0.0
    %1078 = vmatpush1.msra.mxu0 0.0
    %1079 = vmatprep.subr.mxu0 0.0
    %1080 = vmatpush1.msra.mxu0 0.0
    %1081 = vmatprep.subr.mxu0 0.0
    %1082 = vmatpush1.msra.mxu0 0.0
    %1083 = vmatprep.subr.mxu0 0.0
    %1084 = vmatpush1.msra.mxu0 0.0
    %1085 = vmatprep.subr.mxu0 0.0
    %1086 = vmatpush1.msra.mxu0 0.0
    %1087 = vmatprep.subr.mxu0 0.0
    %1088 = vmatpush1.msra.mxu0 0.0
    %1089 = vmatprep.subr.mxu0 0.0
    %1090 = vmatpush1.msra.mxu0 0.0
    %1091 = vmatprep.subr.mxu0 0.0
    %1092 = vmatpush1.msra.mxu0 0.0
    %1093 = vmatprep.subr.mxu0 0.0
    %1094 = vmatpush1.msra.mxu0 0.0
    %1095 = vmatprep.subr.mxu0 0.0
    %1096 = vmatpush1.msra.mxu0 0.0
    %1097 = vmatprep.subr.mxu0 0.0
    %1098 = vmatpush1.msra.mxu0 0.0
    %1099 = vmatprep.subr.mxu0 0.0
    %1100 = vmatpush1.msra.mxu0 0.0
    %1101 = vmatprep.subr.mxu0 0.0
    %1102 = vmatpush1.msra.mxu0 0.0
    %1103 = vmatprep.subr.mxu0 %v832
    %1104 = vmatpush1.msra.mxu0 %v831
    %1105 = vmatprep.subr.mxu0 %v828
    %1106 = vmatpush1.msra.mxu0 %v827
    %1107 = vmatprep.subr.mxu0 0.0
    %1108 = vmatpush2.msra.mxu0 0.0
    %1109 = vmatprep.subr.mxu0 0.0
    %1110 = vmatpush2.msra.mxu0 0.0
    %1111 = vmatprep.subr.mxu0 0.0
    %1112 = vmatpush2.msra.mxu0 0.0
    %1113 = vmatprep.subr.mxu0 0.0
    %1114 = vmatpush2.msra.mxu0 0.0
    %1115 = vmatprep.subr.mxu0 0.0
    %1116 = vmatpush2.msra.mxu0 0.0
    %1117 = vmatprep.subr.mxu0 0.0
    %1118 = vmatpush2.msra.mxu0 0.0
    %1119 = vmatprep.subr.mxu0 0.0
    %1120 = vmatpush2.msra.mxu0 0.0
    %1121 = vmatprep.subr.mxu0 0.0
    %1122 = vmatpush2.msra.mxu0 0.0
    %1123 = vmatprep.subr.mxu0 0.0
    %1124 = vmatpush2.msra.mxu0 0.0
    %1125 = vmatprep.subr.mxu0 0.0
    %1126 = vmatpush2.msra.mxu0 0.0
    %1127 = vmatprep.subr.mxu0 0.0
    %1128 = vmatpush2.msra.mxu0 0.0
    %1129 = vmatprep.subr.mxu0 0.0
    %1130 = vmatpush2.msra.mxu0 0.0
    %1131 = vmatprep.subr.mxu0 0.0
    %1132 = vmatpush2.msra.mxu0 0.0
    %1133 = vmatprep.subr.mxu0 0.0
    %1134 = vmatpush2.msra.mxu0 0.0
    %1135 = vmatprep.subr.mxu0 0.0
    %1136 = vmatpush2.msra.mxu0 0.0
    %1137 = vmatprep.subr.mxu0 0.0
    %1138 = vmatpush2.msra.mxu0 0.0
    %1139 = vmatprep.mubr.f32.mxu0 0.0
    %1140 = vmatmul.mubr.f32.gmra.mxu0 %v1002
    %v1141 = vpop.f32.mrf.mxu0
    %v1142 = vadd.f32 0.0, %v1141
    %v1143 = vpop.f32.mrf.mxu0
    %v1144 = vadd.f32 0.0, %v1143
    %1145 = vdwg.mxu0
    %vm1146 = vcmask 1041408
    %v1147 = vsel %vm1146, %v1071, 0.0
    %v1148 = vsel %vm1146, %v1073, 0.0
    %v1149 = vadd.f32 %v1147, %v1148
    %1150 = vadd.xlane.f32.xlu0 %v1149
    %v1151 = vpop.xlane.xlu0 %1150
    %v1152 = vrcp.pop 256.0
    %v1153 = vmul.f32 %v1151, %v1152
    %v1154 = vsel %vm1146, %v1142, 0.0
    %v1155 = vsel %vm1146, %v1144, 0.0
    %v1156 = vadd.f32 %v1154, %v1155
    %1157 = vadd.xlane.f32.xlu0 %v1156
    %v1158 = vpop.xlane.xlu0 %1157
    %v1159 = vmul.f32 %v1158, %v1152
    %vm1160 = vcmask 7168
    %v1161 = vsel %vm1160, %v1153, %v1159
    %v1162 = vld [vmem:[%s10] sm:$0x3]
    %v1163 = vadd.f32 %v1161, %v1162
    %vm1164 = vcmask 9216
    %1165 = vst.msk [vmem:[%s12] sm:$0x3] %vm1164, %v1163
    // Predicated region
    $region54: #{_forward_impl.1} parent=1 // pred_check
      _
    $region55: #{_forward_impl.1} parent=1 // pred_check_branch
      %1167 = sbr.rel (0) target = $region57
    $region56: #{_forward_impl.1} parent=1 // pred_region
      _
    $region57: #{_forward_impl.1} parent=1 // pred_fallthru
      _
    // Predicated region
    $region58: #{_forward_impl.1} parent=1 // pred_check
      _
    $region59: #{_forward_impl.1} parent=1 // pred_check_branch
      %1169 = sbr.rel (0) target = $region61
    $region60: #{_forward_impl.1} parent=1 // pred_region
      _
    $region61: #{_forward_impl.1} parent=1 // pred_fallthru
      _
    // Predicated region
    $region62: #{_forward_impl.1} parent=1 // pred_check
      _
    $region63: #{_forward_impl.1} parent=1 // pred_check_branch
      %1171 = sbr.rel (0) target = $region65
    $region64: #{_forward_impl.1} parent=1 // pred_region
      _
    $region65: #{_forward_impl.1} parent=1 // pred_fallthru
      _
    // Predicated region
    $region66: #{_forward_impl.1} parent=1 // pred_check
      _
    $region67: #{_forward_impl.1} parent=1 // pred_check_branch
      %1173 = sbr.rel (0) target = $region69
    $region68: #{_forward_impl.1} parent=1 // pred_region
      _
    $region69: #{_forward_impl.1} parent=1 // pred_fallthru
      _
    %1174 = vsyncpa [#allocation3], 1
    %1175 = vsyncpa [#allocation5], 1

</llo_original>
